<compile_context>
chip_gen: v6e
topology: v6e:2x2x1
jax: 0.10.0
libtpu: 0.0.40
codegen_flags: <defaults>
</compile_context>

<pallas_src>
from functools import partial

import numpy as np
import jax
import jax.numpy as jnp
from jax.experimental import pallas as pl
from jax.experimental.pallas import tpu as pltpu


def _bilinear_weight_matrix(in_size: int, out_size: int) -> np.ndarray:
    """(out_size, in_size) 1-D linear-interp matrix, align_corners=True
    semantics (matches F.interpolate(..., mode='bilinear', align_corners=True)).
    Built with numpy so it is a compile-time constant under jit."""
    if out_size == 1:
        src = np.zeros((1,), dtype=np.float64)
    else:
        src = np.arange(out_size, dtype=np.float64) * (
            (in_size - 1) / (out_size - 1))
    i0 = np.clip(np.floor(src).astype(np.int64), 0, in_size - 1)
    i1 = np.clip(i0 + 1, 0, in_size - 1)
    w1 = src - i0
    w0 = 1.0 - w1
    w = np.zeros((out_size, in_size), dtype=np.float64)
    w[np.arange(out_size), i0] += w0
    w[np.arange(out_size), i1] += w1
    return w.astype(np.float32)


def _dcan_kernel(x_ref, wwT_ref, wh_ref, cw_ref, cb_ref, o_ref, *, B, C, K):
    # x_ref  : (B*C, H_in, W_in)    VMEM  input channels, batch-stacked
    # wwT_ref: (W_in, W_out)        VMEM  width-interp weights (transposed)
    # wh_ref : (H_out, H_in)        VMEM  height-interp weights
    # cw_ref : (K, C)               SMEM  1x1 conv weights (scalars)
    # cb_ref : (K,)                 SMEM  conv bias (scalars)
    # o_ref  : (B, K, H_out, W_out) VMEM  NCHW output
    N, H_in, W_in = x_ref.shape
    H_out = wh_ref.shape[0]
    W_out = wwT_ref.shape[1]

    x = x_ref[...]                                              # (N, H_in, W_in)

    # Width interpolation (contract W_in): batched-over-N MXU matmul.
    wwT = jnp.broadcast_to(wwT_ref[...], (N, W_in, W_out))
    z = jnp.einsum('nhw,nwp->nhp', x, wwT,
                   preferred_element_type=jnp.float32)          # (N, H_in, W_out)

    # Height interpolation (contract H_in): batched-over-N MXU matmul.
    wh = jnp.broadcast_to(wh_ref[...], (N, H_out, H_in))
    up = jnp.einsum('noh,nhp->nop', wh, z,
                    preferred_element_type=jnp.float32)         # (N, H_out, W_out)

    # 1x1 conv (contract C) + bias + ReLU, fully unrolled: scalar(SMEM) * tile
    # FMAs on the VPU -- free under the DMA / launch-overhead bound.
    for b in range(B):
        for k in range(K):
            acc = cw_ref[k, 0] * up[b * C + 0]
            for c in range(1, C):
                acc = acc + cw_ref[k, c] * up[b * C + c]
            o_ref[b, k] = jnp.maximum(acc + cb_ref[k], 0.0)


@partial(jax.jit, static_argnames=("output_dim",))
def dcan_upsample_interp_block(x, conv_w, conv_b, *, output_dim):
    """x: (B, C, H_in, W_in) f32. conv_w: (K=2, C). conv_b: (K,).
    Returns (B, K, output_dim, output_dim) f32, numerically matching
    ReLU(Conv1x1(interpolate(x, size=output_dim, bilinear, align_corners=True)))."""
    B, C, H_in, W_in = x.shape
    K = conv_w.shape[0]
    H_out = W_out = int(output_dim)

    # Compile-time-constant interpolation weights (numpy at trace time).
    wh = jnp.asarray(_bilinear_weight_matrix(H_in, H_out))       # (H_out, H_in)
    wwT = jnp.asarray(_bilinear_weight_matrix(W_in, W_out).T)    # (W_in, W_out)

    x_n = x.astype(jnp.float32).reshape(B * C, H_in, W_in)

    flops = (B * C * 2 * H_in * W_in * W_out          # width interp
             + B * C * 2 * H_out * H_in * W_out       # height interp
             + B * K * C * 2 * H_out * W_out)         # 1x1 conv
    bytes_accessed = 4 * (x_n.size + wh.size + wwT.size + conv_w.size
                          + conv_b.size + B * K * H_out * W_out)

    kernel = partial(_dcan_kernel, B=B, C=C, K=K)

    out = pl.pallas_call(
        kernel,
        out_shape=jax.ShapeDtypeStruct((B, K, H_out, W_out), jnp.float32),
        grid=(1,),  # ~30 KiB total traffic: one step, no tiling needed.
        in_specs=[
            pl.BlockSpec((B * C, H_in, W_in), lambda i: (0, 0, 0)),
            pl.BlockSpec((W_in, W_out), lambda i: (0, 0)),
            pl.BlockSpec((H_out, H_in), lambda i: (0, 0)),
            pl.BlockSpec(memory_space=pltpu.MemorySpace.SMEM),   # conv_w scalars
            pl.BlockSpec(memory_space=pltpu.MemorySpace.SMEM),   # conv_b scalars
        ],
        out_specs=pl.BlockSpec((B, K, H_out, W_out), lambda i: (0, 0, 0, 0)),
        compiler_params=pltpu.CompilerParams(
            dimension_semantics=("arbitrary",)),
        cost_estimate=pl.CostEstimate(flops=flops, transcendentals=0,
                                      bytes_accessed=bytes_accessed),
    )(x_n, wwT, wh, conv_w.astype(jnp.float32), conv_b.astype(jnp.float32))

    return out


def _reference(x, conv_w, conv_b, output_dim):
    """Pure-JAX reference with the original (interp -> conv -> ReLU) order."""
    B, C, H_in, W_in = x.shape
    wh = jnp.asarray(_bilinear_weight_matrix(H_in, output_dim))
    ww = jnp.asarray(_bilinear_weight_matrix(W_in, output_dim))
    up = jnp.einsum('oh,bchw->bcow', wh, x)
    up = jnp.einsum('bcow,pw->bcop', up, ww)
    out = jnp.einsum('kc,bcop->bkop', conv_w, up) + conv_b[None, :, None, None]
    return jnp.maximum(out, 0.0)


if __name__ == "__main__":
    key = jax.random.PRNGKey(0)
    k_x, k_w, k_b = jax.random.split(key, 3)

    B, C, H, W = 2, 4, 16, 16
    OUTPUT_DIM = 32           # F.interpolate(size=output_dim) -> square output
    K = 2                     # Conv2d(in_channels, 2, kernel_size=1)

    x = jax.random.normal(k_x, (B, C, H, W), dtype=jnp.float32)
    # nn.Conv2d(in_channels, 2, 1) parameter shapes: weight (2, C, 1, 1) stored
    # as (2, C); bias (2,).
    bound = 1.0 / (C ** 0.5)
    conv_w = jax.random.uniform(k_w, (K, C), minval=-bound, maxval=bound,
                                dtype=jnp.float32)
    conv_b = jax.random.uniform(k_b, (K,), minval=-bound, maxval=bound,
                                dtype=jnp.float32)

    out = dcan_upsample_interp_block(x, conv_w, conv_b, output_dim=OUTPUT_DIM)
    out = jax.block_until_ready(out)

    ref = _reference(x, conv_w, conv_b, OUTPUT_DIM)
    assert out.shape == (B, K, OUTPUT_DIM, OUTPUT_DIM)
    assert jnp.allclose(out, ref, atol=1e-5, rtol=1e-5)

    print("KERNEL_OK")
</pallas_src>

<mosaic_0001>
module attributes {stable_mosaic.version = 11 : i64} {
  func.func @_dcan_kernel(%arg0: i32, %arg1: memref<8x16x16xf32, #tpu.memory_space<vmem>>, %arg2: memref<16x32xf32, #tpu.memory_space<vmem>>, %arg3: memref<32x16xf32, #tpu.memory_space<vmem>>, %arg4: memref<2x4xf32, #tpu.memory_space<smem>>, %arg5: memref<2xf32, #tpu.memory_space<smem>>, %arg6: memref<2x2x32x32xf32, #tpu.memory_space<vmem>>) attributes {dimension_semantics = [#tpu.dimension_semantics<arbitrary>], iteration_bounds = array<i64: 1>, scalar_prefetch = 0 : i64, scratch_operands = 0 : i64, tpu.core_type = #tpu.core_type<tc>, window_params = [{pipeline_mode = #tpu.pipeline_mode<synchronous>, transform_indices = @transform_0, window_bounds = array<i64: 8, 16, 16>}, {pipeline_mode = #tpu.pipeline_mode<synchronous>, transform_indices = @transform_1, window_bounds = array<i64: 16, 32>}, {pipeline_mode = #tpu.pipeline_mode<synchronous>, transform_indices = @transform_2, window_bounds = array<i64: 32, 16>}, {transform_indices = @transform_3, window_bounds = array<i64: 2, 4>}, {transform_indices = @transform_4, window_bounds = array<i64: 2>}, {pipeline_mode = #tpu.pipeline_mode<synchronous>, transform_indices = @transform_5, window_bounds = array<i64: 2, 2, 32, 32>}]} {
    %c0 = arith.constant 0 : index
    %c0_0 = arith.constant 0 : index
    %c0_1 = arith.constant 0 : index
    %0 = vector.load %arg1[%c0, %c0_0, %c0_1] : memref<8x16x16xf32, #tpu.memory_space<vmem>>, vector<8x16x16xf32>
    %c0_2 = arith.constant 0 : index
    %c0_3 = arith.constant 0 : index
    %1 = vector.load %arg2[%c0_2, %c0_3] : memref<16x32xf32, #tpu.memory_space<vmem>>, vector<16x32xf32>
    %2 = vector.shape_cast %1 : vector<16x32xf32> to vector<1x16x32xf32>
    %3 = vector.broadcast %2 : vector<1x16x32xf32> to vector<8x16x32xf32>
    "tpu.trace_start"() <{level = 10 : i32, message = "nhw,nwp->nhp"}> : () -> ()
    %cst = arith.constant dense<0.000000e+00> : vector<8x16x32xf32>
    %4 = tpu.matmul %0, %3, %cst {dimension_numbers = #tpu.dot_dimension_numbers<[2], [1], [1], [2], [0, 0, 0, 1, 1, 2], [0], [0]>} : vector<8x16x16xf32>, vector<8x16x32xf32>, vector<8x16x32xf32> -> vector<8x16x32xf32>
    "tpu.trace_stop"() : () -> ()
    %c0_4 = arith.constant 0 : index
    %c0_5 = arith.constant 0 : index
    %5 = vector.load %arg3[%c0_4, %c0_5] : memref<32x16xf32, #tpu.memory_space<vmem>>, vector<32x16xf32>
    %6 = vector.shape_cast %5 : vector<32x16xf32> to vector<1x32x16xf32>
    %7 = vector.broadcast %6 : vector<1x32x16xf32> to vector<8x32x16xf32>
    "tpu.trace_start"() <{level = 10 : i32, message = "noh,nhp->nop"}> : () -> ()
    %cst_6 = arith.constant dense<0.000000e+00> : vector<8x32x32xf32>
    %8 = tpu.matmul %7, %4, %cst_6 {dimension_numbers = #tpu.dot_dimension_numbers<[2], [1], [1], [2], [0, 0, 0, 1, 1, 2], [0], [0]>} : vector<8x32x16xf32>, vector<8x16x32xf32>, vector<8x32x32xf32> -> vector<8x32x32xf32>
    "tpu.trace_stop"() : () -> ()
    %c0_7 = arith.constant 0 : index
    %c0_8 = arith.constant 0 : index
    %9 = memref.load %arg4[%c0_7, %c0_8] : memref<2x4xf32, #tpu.memory_space<smem>>
    %10 = vector.extract_strided_slice %8 {offsets = [0, 0, 0], sizes = [1, 32, 32], strides = [1, 1, 1]} : vector<8x32x32xf32> to vector<1x32x32xf32>
    %11 = vector.shape_cast %10 : vector<1x32x32xf32> to vector<32x32xf32>
    %12 = vector.broadcast %9 : f32 to vector<32x32xf32>
    %13 = arith.mulf %12, %11 : vector<32x32xf32>
    %c0_9 = arith.constant 0 : index
    %c1 = arith.constant 1 : index
    %14 = memref.load %arg4[%c0_9, %c1] : memref<2x4xf32, #tpu.memory_space<smem>>
    %15 = vector.extract_strided_slice %8 {offsets = [1, 0, 0], sizes = [1, 32, 32], strides = [1, 1, 1]} : vector<8x32x32xf32> to vector<1x32x32xf32>
    %16 = vector.shape_cast %15 : vector<1x32x32xf32> to vector<32x32xf32>
    %17 = vector.broadcast %14 : f32 to vector<32x32xf32>
    %18 = arith.mulf %17, %16 : vector<32x32xf32>
    %19 = arith.addf %13, %18 : vector<32x32xf32>
    %c0_10 = arith.constant 0 : index
    %c2 = arith.constant 2 : index
    %20 = memref.load %arg4[%c0_10, %c2] : memref<2x4xf32, #tpu.memory_space<smem>>
    %21 = vector.extract_strided_slice %8 {offsets = [2, 0, 0], sizes = [1, 32, 32], strides = [1, 1, 1]} : vector<8x32x32xf32> to vector<1x32x32xf32>
    %22 = vector.shape_cast %21 : vector<1x32x32xf32> to vector<32x32xf32>
    %23 = vector.broadcast %20 : f32 to vector<32x32xf32>
    %24 = arith.mulf %23, %22 : vector<32x32xf32>
    %25 = arith.addf %19, %24 : vector<32x32xf32>
    %c0_11 = arith.constant 0 : index
    %c3 = arith.constant 3 : index
    %26 = memref.load %arg4[%c0_11, %c3] : memref<2x4xf32, #tpu.memory_space<smem>>
    %27 = vector.extract_strided_slice %8 {offsets = [3, 0, 0], sizes = [1, 32, 32], strides = [1, 1, 1]} : vector<8x32x32xf32> to vector<1x32x32xf32>
    %28 = vector.shape_cast %27 : vector<1x32x32xf32> to vector<32x32xf32>
    %29 = vector.broadcast %26 : f32 to vector<32x32xf32>
    %30 = arith.mulf %29, %28 : vector<32x32xf32>
    %31 = arith.addf %25, %30 : vector<32x32xf32>
    %c0_12 = arith.constant 0 : index
    %32 = memref.load %arg5[%c0_12] : memref<2xf32, #tpu.memory_space<smem>>
    %33 = vector.broadcast %32 : f32 to vector<32x32xf32>
    %34 = arith.addf %31, %33 : vector<32x32xf32>
    %cst_13 = arith.constant 0.000000e+00 : f32
    %35 = vector.broadcast %cst_13 : f32 to vector<32x32xf32>
    %36 = arith.maximumf %34, %35 : vector<32x32xf32>
    %c0_14 = arith.constant 0 : index
    %c0_15 = arith.constant 0 : index
    %c0_16 = arith.constant 0 : index
    %c0_17 = arith.constant 0 : index
    %37 = vector.load %arg6[%c0_14, %c0_15, %c0_16, %c0_17] : memref<2x2x32x32xf32, #tpu.memory_space<vmem>>, vector<1x1x32x32xf32>
    %38 = vector.shape_cast %37 : vector<1x1x32x32xf32> to vector<32x32xf32>
    %39 = vector.shape_cast %36 : vector<32x32xf32> to vector<1x1x32x32xf32>
    tpu.vector_store %arg6[%c0_14, %c0_15, %c0_16, %c0_17], %39 {strides = array<i32>} : memref<2x2x32x32xf32, #tpu.memory_space<vmem>>, vector<1x1x32x32xf32>,
    %c1_18 = arith.constant 1 : index
    %c0_19 = arith.constant 0 : index
    %40 = memref.load %arg4[%c1_18, %c0_19] : memref<2x4xf32, #tpu.memory_space<smem>>
    %41 = vector.extract_strided_slice %8 {offsets = [0, 0, 0], sizes = [1, 32, 32], strides = [1, 1, 1]} : vector<8x32x32xf32> to vector<1x32x32xf32>
    %42 = vector.shape_cast %41 : vector<1x32x32xf32> to vector<32x32xf32>
    %43 = vector.broadcast %40 : f32 to vector<32x32xf32>
    %44 = arith.mulf %43, %42 : vector<32x32xf32>
    %c1_20 = arith.constant 1 : index
    %c1_21 = arith.constant 1 : index
    %45 = memref.load %arg4[%c1_20, %c1_21] : memref<2x4xf32, #tpu.memory_space<smem>>
    %46 = vector.extract_strided_slice %8 {offsets = [1, 0, 0], sizes = [1, 32, 32], strides = [1, 1, 1]} : vector<8x32x32xf32> to vector<1x32x32xf32>
    %47 = vector.shape_cast %46 : vector<1x32x32xf32> to vector<32x32xf32>
    %48 = vector.broadcast %45 : f32 to vector<32x32xf32>
    %49 = arith.mulf %48, %47 : vector<32x32xf32>
    %50 = arith.addf %44, %49 : vector<32x32xf32>
    %c1_22 = arith.constant 1 : index
    %c2_23 = arith.constant 2 : index
    %51 = memref.load %arg4[%c1_22, %c2_23] : memref<2x4xf32, #tpu.memory_space<smem>>
    %52 = vector.extract_strided_slice %8 {offsets = [2, 0, 0], sizes = [1, 32, 32], strides = [1, 1, 1]} : vector<8x32x32xf32> to vector<1x32x32xf32>
    %53 = vector.shape_cast %52 : vector<1x32x32xf32> to vector<32x32xf32>
    %54 = vector.broadcast %51 : f32 to vector<32x32xf32>
    %55 = arith.mulf %54, %53 : vector<32x32xf32>
    %56 = arith.addf %50, %55 : vector<32x32xf32>
    %c1_24 = arith.constant 1 : index
    %c3_25 = arith.constant 3 : index
    %57 = memref.load %arg4[%c1_24, %c3_25] : memref<2x4xf32, #tpu.memory_space<smem>>
    %58 = vector.extract_strided_slice %8 {offsets = [3, 0, 0], sizes = [1, 32, 32], strides = [1, 1, 1]} : vector<8x32x32xf32> to vector<1x32x32xf32>
    %59 = vector.shape_cast %58 : vector<1x32x32xf32> to vector<32x32xf32>
    %60 = vector.broadcast %57 : f32 to vector<32x32xf32>
    %61 = arith.mulf %60, %59 : vector<32x32xf32>
    %62 = arith.addf %56, %61 : vector<32x32xf32>
    %c1_26 = arith.constant 1 : index
    %63 = memref.load %arg5[%c1_26] : memref<2xf32, #tpu.memory_space<smem>>
    %64 = vector.broadcast %63 : f32 to vector<32x32xf32>
    %65 = arith.addf %62, %64 : vector<32x32xf32>
    %cst_27 = arith.constant 0.000000e+00 : f32
    %66 = vector.broadcast %cst_27 : f32 to vector<32x32xf32>
    %67 = arith.maximumf %65, %66 : vector<32x32xf32>
    %c0_28 = arith.constant 0 : index
    %c1_29 = arith.constant 1 : index
    %c0_30 = arith.constant 0 : index
    %c0_31 = arith.constant 0 : index
    %68 = vector.load %arg6[%c0_28, %c1_29, %c0_30, %c0_31] : memref<2x2x32x32xf32, #tpu.memory_space<vmem>>, vector<1x1x32x32xf32>
    %69 = vector.shape_cast %68 : vector<1x1x32x32xf32> to vector<32x32xf32>
    %70 = vector.shape_cast %67 : vector<32x32xf32> to vector<1x1x32x32xf32>
    tpu.vector_store %arg6[%c0_28, %c1_29, %c0_30, %c0_31], %70 {strides = array<i32>} : memref<2x2x32x32xf32, #tpu.memory_space<vmem>>, vector<1x1x32x32xf32>,
    %c0_32 = arith.constant 0 : index
    %c0_33 = arith.constant 0 : index
    %71 = memref.load %arg4[%c0_32, %c0_33] : memref<2x4xf32, #tpu.memory_space<smem>>
    %72 = vector.extract_strided_slice %8 {offsets = [4, 0, 0], sizes = [1, 32, 32], strides = [1, 1, 1]} : vector<8x32x32xf32> to vector<1x32x32xf32>
    %73 = vector.shape_cast %72 : vector<1x32x32xf32> to vector<32x32xf32>
    %74 = vector.broadcast %71 : f32 to vector<32x32xf32>
    %75 = arith.mulf %74, %73 : vector<32x32xf32>
    %c0_34 = arith.constant 0 : index
    %c1_35 = arith.constant 1 : index
    %76 = memref.load %arg4[%c0_34, %c1_35] : memref<2x4xf32, #tpu.memory_space<smem>>
    %77 = vector.extract_strided_slice %8 {offsets = [5, 0, 0], sizes = [1, 32, 32], strides = [1, 1, 1]} : vector<8x32x32xf32> to vector<1x32x32xf32>
    %78 = vector.shape_cast %77 : vector<1x32x32xf32> to vector<32x32xf32>
    %79 = vector.broadcast %76 : f32 to vector<32x32xf32>
    %80 = arith.mulf %79, %78 : vector<32x32xf32>
    %81 = arith.addf %75, %80 : vector<32x32xf32>
    %c0_36 = arith.constant 0 : index
    %c2_37 = arith.constant 2 : index
    %82 = memref.load %arg4[%c0_36, %c2_37] : memref<2x4xf32, #tpu.memory_space<smem>>
    %83 = vector.extract_strided_slice %8 {offsets = [6, 0, 0], sizes = [1, 32, 32], strides = [1, 1, 1]} : vector<8x32x32xf32> to vector<1x32x32xf32>
    %84 = vector.shape_cast %83 : vector<1x32x32xf32> to vector<32x32xf32>
    %85 = vector.broadcast %82 : f32 to vector<32x32xf32>
    %86 = arith.mulf %85, %84 : vector<32x32xf32>
    %87 = arith.addf %81, %86 : vector<32x32xf32>
    %c0_38 = arith.constant 0 : index
    %c3_39 = arith.constant 3 : index
    %88 = memref.load %arg4[%c0_38, %c3_39] : memref<2x4xf32, #tpu.memory_space<smem>>
    %89 = vector.extract_strided_slice %8 {offsets = [7, 0, 0], sizes = [1, 32, 32], strides = [1, 1, 1]} : vector<8x32x32xf32> to vector<1x32x32xf32>
    %90 = vector.shape_cast %89 : vector<1x32x32xf32> to vector<32x32xf32>
    %91 = vector.broadcast %88 : f32 to vector<32x32xf32>
    %92 = arith.mulf %91, %90 : vector<32x32xf32>
    %93 = arith.addf %87, %92 : vector<32x32xf32>
    %c0_40 = arith.constant 0 : index
    %94 = memref.load %arg5[%c0_40] : memref<2xf32, #tpu.memory_space<smem>>
    %95 = vector.broadcast %94 : f32 to vector<32x32xf32>
    %96 = arith.addf %93, %95 : vector<32x32xf32>
    %cst_41 = arith.constant 0.000000e+00 : f32
    %97 = vector.broadcast %cst_41 : f32 to vector<32x32xf32>
    %98 = arith.maximumf %96, %97 : vector<32x32xf32>
    %c1_42 = arith.constant 1 : index
    %c0_43 = arith.constant 0 : index
    %c0_44 = arith.constant 0 : index
    %c0_45 = arith.constant 0 : index
    %99 = vector.load %arg6[%c1_42, %c0_43, %c0_44, %c0_45] : memref<2x2x32x32xf32, #tpu.memory_space<vmem>>, vector<1x1x32x32xf32>
    %100 = vector.shape_cast %99 : vector<1x1x32x32xf32> to vector<32x32xf32>
    %101 = vector.shape_cast %98 : vector<32x32xf32> to vector<1x1x32x32xf32>
    tpu.vector_store %arg6[%c1_42, %c0_43, %c0_44, %c0_45], %101 {strides = array<i32>} : memref<2x2x32x32xf32, #tpu.memory_space<vmem>>, vector<1x1x32x32xf32>,
    %c1_46 = arith.constant 1 : index
    %c0_47 = arith.constant 0 : index
    %102 = memref.load %arg4[%c1_46, %c0_47] : memref<2x4xf32, #tpu.memory_space<smem>>
    %103 = vector.extract_strided_slice %8 {offsets = [4, 0, 0], sizes = [1, 32, 32], strides = [1, 1, 1]} : vector<8x32x32xf32> to vector<1x32x32xf32>
    %104 = vector.shape_cast %103 : vector<1x32x32xf32> to vector<32x32xf32>
    %105 = vector.broadcast %102 : f32 to vector<32x32xf32>
    %106 = arith.mulf %105, %104 : vector<32x32xf32>
    %c1_48 = arith.constant 1 : index
    %c1_49 = arith.constant 1 : index
    %107 = memref.load %arg4[%c1_48, %c1_49] : memref<2x4xf32, #tpu.memory_space<smem>>
    %108 = vector.extract_strided_slice %8 {offsets = [5, 0, 0], sizes = [1, 32, 32], strides = [1, 1, 1]} : vector<8x32x32xf32> to vector<1x32x32xf32>
    %109 = vector.shape_cast %108 : vector<1x32x32xf32> to vector<32x32xf32>
    %110 = vector.broadcast %107 : f32 to vector<32x32xf32>
    %111 = arith.mulf %110, %109 : vector<32x32xf32>
    %112 = arith.addf %106, %111 : vector<32x32xf32>
    %c1_50 = arith.constant 1 : index
    %c2_51 = arith.constant 2 : index
    %113 = memref.load %arg4[%c1_50, %c2_51] : memref<2x4xf32, #tpu.memory_space<smem>>
    %114 = vector.extract_strided_slice %8 {offsets = [6, 0, 0], sizes = [1, 32, 32], strides = [1, 1, 1]} : vector<8x32x32xf32> to vector<1x32x32xf32>
    %115 = vector.shape_cast %114 : vector<1x32x32xf32> to vector<32x32xf32>
    %116 = vector.broadcast %113 : f32 to vector<32x32xf32>
    %117 = arith.mulf %116, %115 : vector<32x32xf32>
    %118 = arith.addf %112, %117 : vector<32x32xf32>
    %c1_52 = arith.constant 1 : index
    %c3_53 = arith.constant 3 : index
    %119 = memref.load %arg4[%c1_52, %c3_53] : memref<2x4xf32, #tpu.memory_space<smem>>
    %120 = vector.extract_strided_slice %8 {offsets = [7, 0, 0], sizes = [1, 32, 32], strides = [1, 1, 1]} : vector<8x32x32xf32> to vector<1x32x32xf32>
    %121 = vector.shape_cast %120 : vector<1x32x32xf32> to vector<32x32xf32>
    %122 = vector.broadcast %119 : f32 to vector<32x32xf32>
    %123 = arith.mulf %122, %121 : vector<32x32xf32>
    %124 = arith.addf %118, %123 : vector<32x32xf32>
    %c1_54 = arith.constant 1 : index
    %125 = memref.load %arg5[%c1_54] : memref<2xf32, #tpu.memory_space<smem>>
    %126 = vector.broadcast %125 : f32 to vector<32x32xf32>
    %127 = arith.addf %124, %126 : vector<32x32xf32>
    %cst_55 = arith.constant 0.000000e+00 : f32
    %128 = vector.broadcast %cst_55 : f32 to vector<32x32xf32>
    %129 = arith.maximumf %127, %128 : vector<32x32xf32>
    %c1_56 = arith.constant 1 : index
    %c1_57 = arith.constant 1 : index
    %c0_58 = arith.constant 0 : index
    %c0_59 = arith.constant 0 : index
    %130 = vector.load %arg6[%c1_56, %c1_57, %c0_58, %c0_59] : memref<2x2x32x32xf32, #tpu.memory_space<vmem>>, vector<1x1x32x32xf32>
    %131 = vector.shape_cast %130 : vector<1x1x32x32xf32> to vector<32x32xf32>
    %132 = vector.shape_cast %129 : vector<32x32xf32> to vector<1x1x32x32xf32>
    tpu.vector_store %arg6[%c1_56, %c1_57, %c0_58, %c0_59], %132 {strides = array<i32>} : memref<2x2x32x32xf32, #tpu.memory_space<vmem>>, vector<1x1x32x32xf32>,
    return
  }
  func.func @transform_0(%arg0: i32) -> (i32, i32, i32) {
    %c0_i32 = arith.constant 0 : i32
    %c0_i32_0 = arith.constant 0 : i32
    %c0_i32_1 = arith.constant 0 : i32
    %c0_i32_2 = arith.constant 0 : i32
    return %c0_i32, %c0_i32_0, %c0_i32_1 : i32, i32, i32
  }
  func.func @transform_1(%arg0: i32) -> (i32, i32) {
    %c0_i32 = arith.constant 0 : i32
    %c0_i32_0 = arith.constant 0 : i32
    %c0_i32_1 = arith.constant 0 : i32
    return %c0_i32, %c0_i32_0 : i32, i32
  }
  func.func @transform_2(%arg0: i32) -> (i32, i32) {
    %c0_i32 = arith.constant 0 : i32
    %c0_i32_0 = arith.constant 0 : i32
    %c0_i32_1 = arith.constant 0 : i32
    return %c0_i32, %c0_i32_0 : i32, i32
  }
  func.func @transform_3(%arg0: i32) -> (i32, i32) {
    %c0_i32 = arith.constant 0 : i32
    %c0_i32_0 = arith.constant 0 : i32
    %c0_i32_1 = arith.constant 0 : i32
    return %c0_i32, %c0_i32_0 : i32, i32
  }
  func.func @transform_4(%arg0: i32) -> i32 {
    %c0_i32 = arith.constant 0 : i32
    %c0_i32_0 = arith.constant 0 : i32
    return %c0_i32 : i32
  }
  func.func @transform_5(%arg0: i32) -> (i32, i32, i32, i32) {
    %c0_i32 = arith.constant 0 : i32
    %c0_i32_0 = arith.constant 0 : i32
    %c0_i32_1 = arith.constant 0 : i32
    %c0_i32_2 = arith.constant 0 : i32
    %c0_i32_3 = arith.constant 0 : i32
    return %c0_i32, %c0_i32_0, %c0_i32_1, %c0_i32_2 : i32, i32, i32, i32
  }
}

</mosaic_0001>

<llo_original>
// kernel: dcan_upsample_interp_block.1
$region0: #{dcan_upsample_interp_block.1}
  #allocation0 [shape = 'u32[]', space=smem, size = 0x4, offset = 0x4, fixed_abs, tag = 'smem constant byte address 0x4 - core index']
  #allocation1 [shape = 'u32[144,128]{1,0:T(1,128)}', space=vmem, size = 0x12000, scoped, tag = 'internal scratch']
  %s0 = inlined_call_operand.hbm [shape: f32[8,16,16], index: 0, kind: input, shape index: {}]
  %s1 = inlined_call_operand.hbm [shape: f32[16,32], index: 1, kind: input, shape index: {}]
  %s2 = inlined_call_operand.hbm [shape: f32[32,16], index: 2, kind: input, shape index: {}]
  %s3 = inlined_call_operand.vmem [shape: f32[2,4], index: 3, kind: input, shape index: {}]
  %s4 = inlined_call_operand.vmem [shape: f32[2], index: 4, kind: input, shape index: {}]
  %s5 = inlined_call_operand.hbm [shape: f32[2,2,32,32], index: 5, kind: output, shape index: {}]
  %s6 = sld [smem:[#allocation0]]
  $region50: #{dcan_upsample_interp_block.1} parent=0
    _
  %s8 = ssub.s32 1, %s6
  %s9 = scalar_select 0, %s8, %s6
  $region1: #{dcan_upsample_interp_block.1} parent=0
    #allocation2 [shape = 'u8[65536]{0}', space=vmem, size = 0x10000, scoped, tag = 'input window, operand 0, single buffered']
    #allocation3 [shape = 's32[1]{0}', space=sflag, size = 0x4, scoped, tag = 'scoped memory for dcan_upsample_interp_block.1']
    #allocation4 [shape = 's32[1]{0}', space=sflag, size = 0x4, scoped, tag = 'scoped memory for dcan_upsample_interp_block.1']
    #allocation5 [shape = 's32[1]{0}', space=sflag, size = 0x4, scoped, tag = 'scoped memory for dcan_upsample_interp_block.1']
    #allocation6 [shape = 'u8[8192]{0}', space=vmem, size = 0x2000, scoped, tag = 'input window, operand 1, single buffered']
    #allocation7 [shape = 's32[1]{0}', space=sflag, size = 0x4, scoped, tag = 'scoped memory for dcan_upsample_interp_block.1']
    #allocation8 [shape = 'u8[16384]{0}', space=vmem, size = 0x4000, scoped, tag = 'input window, operand 2, single buffered']
    #allocation9 [shape = 'u8[1024]{0}', space=smem, size = 0x400, scoped, tag = 'input window, operand 3, single buffered']
    #allocation10 [shape = 'u8[512]{0}', space=smem, size = 0x200, scoped, tag = 'input window, operand 4, single buffered']
    #allocation11 [shape = 's32[1]{0}', space=sflag, size = 0x4, scoped, tag = 'scoped memory for dcan_upsample_interp_block.1']
    #allocation12 [shape = 'u8[65536]{0}', space=vmem, size = 0x10000, scoped, tag = 'output window, operand 0, single buffered']
    %10 = vsyncpa [#allocation3], 0
    %11 = vsyncpa [#allocation7], 0
    %12 = vsyncpa [#allocation5], 0
    %13 = vsyncpa [#allocation11], 0
    %14 = vsyncpa [#allocation4], 0
    // Predicated region
    $region2: #{dcan_upsample_interp_block.1} parent=1 // pred_check
      _
    $region3: #{dcan_upsample_interp_block.1} parent=1 // pred_check_branch
      %16 = sbr.rel (0) target = $region5
    $region4: #{dcan_upsample_interp_block.1} parent=1 // pred_region
      %s18 = ssub.s32 2048, 2048
      %19 = vsyncadd [#allocation3], %s18
      %s20 = sshll.u32 [#allocation2], 4
      %s21 = int_to_ptr.vmem [resolvable:$true] %s20
      %26 = dma.hbm_to_vmem [thread:$0]  %s0, 2048, %s21, [#allocation3], 128, 128, 8
    $region5: #{dcan_upsample_interp_block.1} parent=1 // pred_fallthru
      _
    // Predicated region
    $region6: #{dcan_upsample_interp_block.1} parent=1 // pred_check
      _
    $region7: #{dcan_upsample_interp_block.1} parent=1 // pred_check_branch
      %28 = sbr.rel (0) target = $region9
    $region8: #{dcan_upsample_interp_block.1} parent=1 // pred_region
      %s30 = ssub.s32 256, 256
      %31 = vsyncadd [#allocation7], %s30
      %s32 = sshll.u32 [#allocation6], 4
      %s33 = int_to_ptr.vmem [resolvable:$true] %s32
      %38 = dma.hbm_to_vmem [thread:$0]  %s1, 256, %s33, [#allocation7], 128, 128, 8
    $region9: #{dcan_upsample_interp_block.1} parent=1 // pred_fallthru
      _
    // Predicated region
    $region10: #{dcan_upsample_interp_block.1} parent=1 // pred_check
      _
    $region11: #{dcan_upsample_interp_block.1} parent=1 // pred_check_branch
      %40 = sbr.rel (0) target = $region13
    $region12: #{dcan_upsample_interp_block.1} parent=1 // pred_region
      %s42 = ssub.s32 512, 512
      %43 = vsyncadd [#allocation7], %s42
      %s44 = sshll.u32 [#allocation8], 4
      %s45 = int_to_ptr.vmem [resolvable:$true] %s44
      %50 = dma.hbm_to_vmem [thread:$0]  %s2, 512, %s45, [#allocation7], 128, 128, 8
    $region13: #{dcan_upsample_interp_block.1} parent=1 // pred_fallthru
      _
    // Predicated region
    $region14: #{dcan_upsample_interp_block.1} parent=1 // pred_check
      _
    $region15: #{dcan_upsample_interp_block.1} parent=1 // pred_check_branch
      %52 = sbr.rel (0) target = $region17
    $region16: #{dcan_upsample_interp_block.1} parent=1 // pred_region
      %s54 = ssub.s32 32, 32
      %55 = vsyncadd [#allocation5], %s54
      %s57 = sshll.u32 %s3, 4
      %s58 = int_to_ptr.vmem [resolvable:$true] %s57
      %60 = dma.vmem_to_smem %s58, 32, [#allocation9], [#allocation5]
    $region17: #{dcan_upsample_interp_block.1} parent=1 // pred_fallthru
      _
    // Predicated region
    $region18: #{dcan_upsample_interp_block.1} parent=1 // pred_check
      _
    $region19: #{dcan_upsample_interp_block.1} parent=1 // pred_check_branch
      %62 = sbr.rel (0) target = $region21
    $region20: #{dcan_upsample_interp_block.1} parent=1 // pred_region
      %s64 = ssub.s32 16, 16
      %65 = vsyncadd [#allocation11], %s64
      %s67 = sshll.u32 %s4, 4
      %s68 = int_to_ptr.vmem [resolvable:$true] %s67
      %70 = dma.vmem_to_smem %s68, 16, [#allocation10], [#allocation11]
    $region21: #{dcan_upsample_interp_block.1} parent=1 // pred_fallthru
      _
    // Predicated region
    $region22: #{dcan_upsample_interp_block.1} parent=1 // pred_check
      _
    $region23: #{dcan_upsample_interp_block.1} parent=1 // pred_check_branch
      %72 = sbr.rel (0) target = $region25
    $region24: #{dcan_upsample_interp_block.1} parent=1 // pred_region
      %73 = dma.done [#allocation3], 2048
    $region25: #{dcan_upsample_interp_block.1} parent=1 // pred_fallthru
      _
    // Predicated region
    $region26: #{dcan_upsample_interp_block.1} parent=1 // pred_check
      _
    $region27: #{dcan_upsample_interp_block.1} parent=1 // pred_check_branch
      %75 = sbr.rel (0) target = $region29
    $region28: #{dcan_upsample_interp_block.1} parent=1 // pred_region
      %76 = dma.done [#allocation7], 256
    $region29: #{dcan_upsample_interp_block.1} parent=1 // pred_fallthru
      _
    // Predicated region
    $region30: #{dcan_upsample_interp_block.1} parent=1 // pred_check
      _
    $region31: #{dcan_upsample_interp_block.1} parent=1 // pred_check_branch
      %78 = sbr.rel (0) target = $region33
    $region32: #{dcan_upsample_interp_block.1} parent=1 // pred_region
      %79 = dma.done [#allocation7], 512
    $region33: #{dcan_upsample_interp_block.1} parent=1 // pred_fallthru
      _
    // Predicated region
    $region34: #{dcan_upsample_interp_block.1} parent=1 // pred_check
      _
    $region35: #{dcan_upsample_interp_block.1} parent=1 // pred_check_branch
      %81 = sbr.rel (0) target = $region37
    $region36: #{dcan_upsample_interp_block.1} parent=1 // pred_region
      %82 = dma.done [#allocation5], 32
    $region37: #{dcan_upsample_interp_block.1} parent=1 // pred_fallthru
      _
    // Predicated region
    $region38: #{dcan_upsample_interp_block.1} parent=1 // pred_check
      _
    $region39: #{dcan_upsample_interp_block.1} parent=1 // pred_check_branch
      %84 = sbr.rel (0) target = $region41
    $region40: #{dcan_upsample_interp_block.1} parent=1 // pred_region
      %85 = dma.done [#allocation11], 16
    $region41: #{dcan_upsample_interp_block.1} parent=1 // pred_fallthru
      _
    %86 = sfence
    %v87 = vld [vmem:[#allocation2] sm:$0xff]
    %v88 = vld [vmem:[#allocation2 + $0x8] sm:$0xff]
    %v89 = vld [vmem:[#allocation2 + $0x10] sm:$0xff]
    %v90 = vld [vmem:[#allocation2 + $0x18] sm:$0xff]
    %v91 = vld [vmem:[#allocation2 + $0x20] sm:$0xff]
    %v92 = vld [vmem:[#allocation2 + $0x28] sm:$0xff]
    %v93 = vld [vmem:[#allocation2 + $0x30] sm:$0xff]
    %v94 = vld [vmem:[#allocation2 + $0x38] sm:$0xff]
    %v95 = vld [vmem:[#allocation2 + $0x40] sm:$0xff]
    %v96 = vld [vmem:[#allocation2 + $0x48] sm:$0xff]
    %v97 = vld [vmem:[#allocation2 + $0x50] sm:$0xff]
    %v98 = vld [vmem:[#allocation2 + $0x58] sm:$0xff]
    %v99 = vld [vmem:[#allocation2 + $0x60] sm:$0xff]
    %v100 = vld [vmem:[#allocation2 + $0x68] sm:$0xff]
    %v101 = vld [vmem:[#allocation2 + $0x70] sm:$0xff]
    %v102 = vld [vmem:[#allocation2 + $0x78] sm:$0xff]
    %v103 = vld [vmem:[#allocation6] sm:$0xff]
    %v104 = vld [vmem:[#allocation6 + $0x8] sm:$0xff]
    %vm105 = vcmask 130048
    %v107 = vsel %vm105, %v87, 0
    %v110 = vsel %vm105, %v88, 0
    %112 = vmatprep.subr.mxu0 0.0
    %113 = vmatpush1.msra.mxu0 0.0
    %114 = vmatprep.subr.mxu0 0.0
    %115 = vmatpush1.msra.mxu0 0.0
    %116 = vmatprep.subr.mxu0 0.0
    %117 = vmatpush1.msra.mxu0 0.0
    %118 = vmatprep.subr.mxu0 0.0
    %119 = vmatpush1.msra.mxu0 0.0
    %120 = vmatprep.subr.mxu0 0.0
    %121 = vmatpush1.msra.mxu0 0.0
    %122 = vmatprep.subr.mxu0 0.0
    %123 = vmatpush1.msra.mxu0 0.0
    %124 = vmatprep.subr.mxu0 0.0
    %125 = vmatpush1.msra.mxu0 0.0
    %126 = vmatprep.subr.mxu0 0.0
    %127 = vmatpush1.msra.mxu0 0.0
    %128 = vmatprep.subr.mxu0 0.0
    %129 = vmatpush1.msra.mxu0 0.0
    %130 = vmatprep.subr.mxu0 0.0
    %131 = vmatpush1.msra.mxu0 0.0
    %132 = vmatprep.subr.mxu0 0.0
    %133 = vmatpush1.msra.mxu0 0.0
    %134 = vmatprep.subr.mxu0 0.0
    %135 = vmatpush1.msra.mxu0 0.0
    %136 = vmatprep.subr.mxu0 0.0
    %137 = vmatpush1.msra.mxu0 0.0
    %138 = vmatprep.subr.mxu0 0.0
    %139 = vmatpush1.msra.mxu0 0.0
    %140 = vmatprep.subr.mxu0 0.0
    %141 = vmatpush1.msra.mxu0 %v104
    %142 = vmatprep.subr.mxu0 0.0
    %143 = vmatpush1.msra.mxu0 %v103
    %144 = vmatprep.subr.mxu0 0.0
    %145 = vmatpush2.msra.mxu0 0.0
    %146 = vmatprep.subr.mxu0 0.0
    %147 = vmatpush2.msra.mxu0 0.0
    %148 = vmatprep.subr.mxu0 0.0
    %149 = vmatpush2.msra.mxu0 0.0
    %150 = vmatprep.subr.mxu0 0.0
    %151 = vmatpush2.msra.mxu0 0.0
    %152 = vmatprep.subr.mxu0 0.0
    %153 = vmatpush2.msra.mxu0 0.0
    %154 = vmatprep.subr.mxu0 0.0
    %155 = vmatpush2.msra.mxu0 0.0
    %156 = vmatprep.subr.mxu0 0.0
    %157 = vmatpush2.msra.mxu0 0.0
    %158 = vmatprep.subr.mxu0 0.0
    %159 = vmatpush2.msra.mxu0 0.0
    %160 = vmatprep.subr.mxu0 0.0
    %161 = vmatpush2.msra.mxu0 0.0
    %162 = vmatprep.subr.mxu0 0.0
    %163 = vmatpush2.msra.mxu0 0.0
    %164 = vmatprep.subr.mxu0 0.0
    %165 = vmatpush2.msra.mxu0 0.0
    %166 = vmatprep.subr.mxu0 0.0
    %167 = vmatpush2.msra.mxu0 0.0
    %168 = vmatprep.subr.mxu0 0.0
    %169 = vmatpush2.msra.mxu0 0.0
    %170 = vmatprep.subr.mxu0 0.0
    %171 = vmatpush2.msra.mxu0 0.0
    %172 = vmatprep.subr.mxu0 0.0
    %173 = vmatpush2.msra.mxu0 0.0
    %174 = vmatprep.subr.mxu0 0.0
    %175 = vmatpush2.msra.mxu0 0.0
    %176 = vmatprep.mubr.f32.mxu0 0.0
    %177 = vmatmul.mubr.f32.gmra.mxu0 %v107
    %v178 = vpop.f32.mrf.mxu0
    %v179 = vadd.f32 0.0, %v178
    %v180 = vpop.f32.mrf.mxu0
    %181 = vmatprep.mubr.f32.mxu0 0.0
    %182 = vmatmul.mubr.f32.gmra.mxu0 %v110
    %v183 = vpop.f32.mrf.mxu0
    %v184 = vadd.f32 0.0, %v183
    %v185 = vpop.f32.mrf.mxu0
    %186 = vdwg.mxu0
    %v188 = vsel %vm105, %v89, 0
    %v191 = vsel %vm105, %v90, 0
    %193 = vmatprep.subr.mxu0 0.0
    %194 = vmatpush1.msra.mxu0 0.0
    %195 = vmatprep.subr.mxu0 0.0
    %196 = vmatpush1.msra.mxu0 0.0
    %197 = vmatprep.subr.mxu0 0.0
    %198 = vmatpush1.msra.mxu0 0.0
    %199 = vmatprep.subr.mxu0 0.0
    %200 = vmatpush1.msra.mxu0 0.0
    %201 = vmatprep.subr.mxu0 0.0
    %202 = vmatpush1.msra.mxu0 0.0
    %203 = vmatprep.subr.mxu0 0.0
    %204 = vmatpush1.msra.mxu0 0.0
    %205 = vmatprep.subr.mxu0 0.0
    %206 = vmatpush1.msra.mxu0 0.0
    %207 = vmatprep.subr.mxu0 0.0
    %208 = vmatpush1.msra.mxu0 0.0
    %209 = vmatprep.subr.mxu0 0.0
    %210 = vmatpush1.msra.mxu0 0.0
    %211 = vmatprep.subr.mxu0 0.0
    %212 = vmatpush1.msra.mxu0 0.0
    %213 = vmatprep.subr.mxu0 0.0
    %214 = vmatpush1.msra.mxu0 0.0
    %215 = vmatprep.subr.mxu0 0.0
    %216 = vmatpush1.msra.mxu0 0.0
    %217 = vmatprep.subr.mxu0 0.0
    %218 = vmatpush1.msra.mxu0 0.0
    %219 = vmatprep.subr.mxu0 0.0
    %220 = vmatpush1.msra.mxu0 0.0
    %221 = vmatprep.subr.mxu0 0.0
    %222 = vmatpush1.msra.mxu0 %v104
    %223 = vmatprep.subr.mxu0 0.0
    %224 = vmatpush1.msra.mxu0 %v103
    %225 = vmatprep.subr.mxu0 0.0
    %226 = vmatpush2.msra.mxu0 0.0
    %227 = vmatprep.subr.mxu0 0.0
    %228 = vmatpush2.msra.mxu0 0.0
    %229 = vmatprep.subr.mxu0 0.0
    %230 = vmatpush2.msra.mxu0 0.0
    %231 = vmatprep.subr.mxu0 0.0
    %232 = vmatpush2.msra.mxu0 0.0
    %233 = vmatprep.subr.mxu0 0.0
    %234 = vmatpush2.msra.mxu0 0.0
    %235 = vmatprep.subr.mxu0 0.0
    %236 = vmatpush2.msra.mxu0 0.0
    %237 = vmatprep.subr.mxu0 0.0
    %238 = vmatpush2.msra.mxu0 0.0
    %239 = vmatprep.subr.mxu0 0.0
    %240 = vmatpush2.msra.mxu0 0.0
    %241 = vmatprep.subr.mxu0 0.0
    %242 = vmatpush2.msra.mxu0 0.0
    %243 = vmatprep.subr.mxu0 0.0
    %244 = vmatpush2.msra.mxu0 0.0
    %245 = vmatprep.subr.mxu0 0.0
    %246 = vmatpush2.msra.mxu0 0.0
    %247 = vmatprep.subr.mxu0 0.0
    %248 = vmatpush2.msra.mxu0 0.0
    %249 = vmatprep.subr.mxu0 0.0
    %250 = vmatpush2.msra.mxu0 0.0
    %251 = vmatprep.subr.mxu0 0.0
    %252 = vmatpush2.msra.mxu0 0.0
    %253 = vmatprep.subr.mxu0 0.0
    %254 = vmatpush2.msra.mxu0 0.0
    %255 = vmatprep.subr.mxu0 0.0
    %256 = vmatpush2.msra.mxu0 0.0
    %257 = vmatprep.mubr.f32.mxu0 0.0
    %258 = vmatmul.mubr.f32.gmra.mxu0 %v188
    %v259 = vpop.f32.mrf.mxu0
    %v260 = vadd.f32 0.0, %v259
    %v261 = vpop.f32.mrf.mxu0
    %262 = vmatprep.mubr.f32.mxu0 0.0
    %263 = vmatmul.mubr.f32.gmra.mxu0 %v191
    %v264 = vpop.f32.mrf.mxu0
    %v265 = vadd.f32 0.0, %v264
    %v266 = vpop.f32.mrf.mxu0
    %267 = vdwg.mxu0
    %v269 = vsel %vm105, %v91, 0
    %v272 = vsel %vm105, %v92, 0
    %274 = vmatprep.subr.mxu0 0.0
    %275 = vmatpush1.msra.mxu0 0.0
    %276 = vmatprep.subr.mxu0 0.0
    %277 = vmatpush1.msra.mxu0 0.0
    %278 = vmatprep.subr.mxu0 0.0
    %279 = vmatpush1.msra.mxu0 0.0
    %280 = vmatprep.subr.mxu0 0.0
    %281 = vmatpush1.msra.mxu0 0.0
    %282 = vmatprep.subr.mxu0 0.0
    %283 = vmatpush1.msra.mxu0 0.0
    %284 = vmatprep.subr.mxu0 0.0
    %285 = vmatpush1.msra.mxu0 0.0
    %286 = vmatprep.subr.mxu0 0.0
    %287 = vmatpush1.msra.mxu0 0.0
    %288 = vmatprep.subr.mxu0 0.0
    %289 = vmatpush1.msra.mxu0 0.0
    %290 = vmatprep.subr.mxu0 0.0
    %291 = vmatpush1.msra.mxu0 0.0
    %292 = vmatprep.subr.mxu0 0.0
    %293 = vmatpush1.msra.mxu0 0.0
    %294 = vmatprep.subr.mxu0 0.0
    %295 = vmatpush1.msra.mxu0 0.0
    %296 = vmatprep.subr.mxu0 0.0
    %297 = vmatpush1.msra.mxu0 0.0
    %298 = vmatprep.subr.mxu0 0.0
    %299 = vmatpush1.msra.mxu0 0.0
    %300 = vmatprep.subr.mxu0 0.0
    %301 = vmatpush1.msra.mxu0 0.0
    %302 = vmatprep.subr.mxu0 0.0
    %303 = vmatpush1.msra.mxu0 %v104
    %304 = vmatprep.subr.mxu0 0.0
    %305 = vmatpush1.msra.mxu0 %v103
    %306 = vmatprep.subr.mxu0 0.0
    %307 = vmatpush2.msra.mxu0 0.0
    %308 = vmatprep.subr.mxu0 0.0
    %309 = vmatpush2.msra.mxu0 0.0
    %310 = vmatprep.subr.mxu0 0.0
    %311 = vmatpush2.msra.mxu0 0.0
    %312 = vmatprep.subr.mxu0 0.0
    %313 = vmatpush2.msra.mxu0 0.0
    %314 = vmatprep.subr.mxu0 0.0
    %315 = vmatpush2.msra.mxu0 0.0
    %316 = vmatprep.subr.mxu0 0.0
    %317 = vmatpush2.msra.mxu0 0.0
    %318 = vmatprep.subr.mxu0 0.0
    %319 = vmatpush2.msra.mxu0 0.0
    %320 = vmatprep.subr.mxu0 0.0
    %321 = vmatpush2.msra.mxu0 0.0
    %322 = vmatprep.subr.mxu0 0.0
    %323 = vmatpush2.msra.mxu0 0.0
    %324 = vmatprep.subr.mxu0 0.0
    %325 = vmatpush2.msra.mxu0 0.0
    %326 = vmatprep.subr.mxu0 0.0
    %327 = vmatpush2.msra.mxu0 0.0
    %328 = vmatprep.subr.mxu0 0.0
    %329 = vmatpush2.msra.mxu0 0.0
    %330 = vmatprep.subr.mxu0 0.0
    %331 = vmatpush2.msra.mxu0 0.0
    %332 = vmatprep.subr.mxu0 0.0
    %333 = vmatpush2.msra.mxu0 0.0
    %334 = vmatprep.subr.mxu0 0.0
    %335 = vmatpush2.msra.mxu0 0.0
    %336 = vmatprep.subr.mxu0 0.0
    %337 = vmatpush2.msra.mxu0 0.0
    %338 = vmatprep.mubr.f32.mxu0 0.0
    %339 = vmatmul.mubr.f32.gmra.mxu0 %v269
    %v340 = vpop.f32.mrf.mxu0
    %v341 = vadd.f32 0.0, %v340
    %v342 = vpop.f32.mrf.mxu0
    %343 = vmatprep.mubr.f32.mxu0 0.0
    %344 = vmatmul.mubr.f32.gmra.mxu0 %v272
    %v345 = vpop.f32.mrf.mxu0
    %v346 = vadd.f32 0.0, %v345
    %v347 = vpop.f32.mrf.mxu0
    %348 = vdwg.mxu0
    %v350 = vsel %vm105, %v93, 0
    %v353 = vsel %vm105, %v94, 0
    %355 = vmatprep.subr.mxu0 0.0
    %356 = vmatpush1.msra.mxu0 0.0
    %357 = vmatprep.subr.mxu0 0.0
    %358 = vmatpush1.msra.mxu0 0.0
    %359 = vmatprep.subr.mxu0 0.0
    %360 = vmatpush1.msra.mxu0 0.0
    %361 = vmatprep.subr.mxu0 0.0
    %362 = vmatpush1.msra.mxu0 0.0
    %363 = vmatprep.subr.mxu0 0.0
    %364 = vmatpush1.msra.mxu0 0.0
    %365 = vmatprep.subr.mxu0 0.0
    %366 = vmatpush1.msra.mxu0 0.0
    %367 = vmatprep.subr.mxu0 0.0
    %368 = vmatpush1.msra.mxu0 0.0
    %369 = vmatprep.subr.mxu0 0.0
    %370 = vmatpush1.msra.mxu0 0.0
    %371 = vmatprep.subr.mxu0 0.0
    %372 = vmatpush1.msra.mxu0 0.0
    %373 = vmatprep.subr.mxu0 0.0
    %374 = vmatpush1.msra.mxu0 0.0
    %375 = vmatprep.subr.mxu0 0.0
    %376 = vmatpush1.msra.mxu0 0.0
    %377 = vmatprep.subr.mxu0 0.0
    %378 = vmatpush1.msra.mxu0 0.0
    %379 = vmatprep.subr.mxu0 0.0
    %380 = vmatpush1.msra.mxu0 0.0
    %381 = vmatprep.subr.mxu0 0.0
    %382 = vmatpush1.msra.mxu0 0.0
    %383 = vmatprep.subr.mxu0 0.0
    %384 = vmatpush1.msra.mxu0 %v104
    %385 = vmatprep.subr.mxu0 0.0
    %386 = vmatpush1.msra.mxu0 %v103
    %387 = vmatprep.subr.mxu0 0.0
    %388 = vmatpush2.msra.mxu0 0.0
    %389 = vmatprep.subr.mxu0 0.0
    %390 = vmatpush2.msra.mxu0 0.0
    %391 = vmatprep.subr.mxu0 0.0
    %392 = vmatpush2.msra.mxu0 0.0
    %393 = vmatprep.subr.mxu0 0.0
    %394 = vmatpush2.msra.mxu0 0.0
    %395 = vmatprep.subr.mxu0 0.0
    %396 = vmatpush2.msra.mxu0 0.0
    %397 = vmatprep.subr.mxu0 0.0
    %398 = vmatpush2.msra.mxu0 0.0
    %399 = vmatprep.subr.mxu0 0.0
    %400 = vmatpush2.msra.mxu0 0.0
    %401 = vmatprep.subr.mxu0 0.0
    %402 = vmatpush2.msra.mxu0 0.0
    %403 = vmatprep.subr.mxu0 0.0
    %404 = vmatpush2.msra.mxu0 0.0
    %405 = vmatprep.subr.mxu0 0.0
    %406 = vmatpush2.msra.mxu0 0.0
    %407 = vmatprep.subr.mxu0 0.0
    %408 = vmatpush2.msra.mxu0 0.0
    %409 = vmatprep.subr.mxu0 0.0
    %410 = vmatpush2.msra.mxu0 0.0
    %411 = vmatprep.subr.mxu0 0.0
    %412 = vmatpush2.msra.mxu0 0.0
    %413 = vmatprep.subr.mxu0 0.0
    %414 = vmatpush2.msra.mxu0 0.0
    %415 = vmatprep.subr.mxu0 0.0
    %416 = vmatpush2.msra.mxu0 0.0
    %417 = vmatprep.subr.mxu0 0.0
    %418 = vmatpush2.msra.mxu0 0.0
    %419 = vmatprep.mubr.f32.mxu0 0.0
    %420 = vmatmul.mubr.f32.gmra.mxu0 %v350
    %v421 = vpop.f32.mrf.mxu0
    %v422 = vadd.f32 0.0, %v421
    %v423 = vpop.f32.mrf.mxu0
    %424 = vmatprep.mubr.f32.mxu0 0.0
    %425 = vmatmul.mubr.f32.gmra.mxu0 %v353
    %v426 = vpop.f32.mrf.mxu0
    %v427 = vadd.f32 0.0, %v426
    %v428 = vpop.f32.mrf.mxu0
    %429 = vdwg.mxu0
    %v431 = vsel %vm105, %v95, 0
    %v434 = vsel %vm105, %v96, 0
    %436 = vmatprep.subr.mxu0 0.0
    %437 = vmatpush1.msra.mxu0 0.0
    %438 = vmatprep.subr.mxu0 0.0
    %439 = vmatpush1.msra.mxu0 0.0
    %440 = vmatprep.subr.mxu0 0.0
    %441 = vmatpush1.msra.mxu0 0.0
    %442 = vmatprep.subr.mxu0 0.0
    %443 = vmatpush1.msra.mxu0 0.0
    %444 = vmatprep.subr.mxu0 0.0
    %445 = vmatpush1.msra.mxu0 0.0
    %446 = vmatprep.subr.mxu0 0.0
    %447 = vmatpush1.msra.mxu0 0.0
    %448 = vmatprep.subr.mxu0 0.0
    %449 = vmatpush1.msra.mxu0 0.0
    %450 = vmatprep.subr.mxu0 0.0
    %451 = vmatpush1.msra.mxu0 0.0
    %452 = vmatprep.subr.mxu0 0.0
    %453 = vmatpush1.msra.mxu0 0.0
    %454 = vmatprep.subr.mxu0 0.0
    %455 = vmatpush1.msra.mxu0 0.0
    %456 = vmatprep.subr.mxu0 0.0
    %457 = vmatpush1.msra.mxu0 0.0
    %458 = vmatprep.subr.mxu0 0.0
    %459 = vmatpush1.msra.mxu0 0.0
    %460 = vmatprep.subr.mxu0 0.0
    %461 = vmatpush1.msra.mxu0 0.0
    %462 = vmatprep.subr.mxu0 0.0
    %463 = vmatpush1.msra.mxu0 0.0
    %464 = vmatprep.subr.mxu0 0.0
    %465 = vmatpush1.msra.mxu0 %v104
    %466 = vmatprep.subr.mxu0 0.0
    %467 = vmatpush1.msra.mxu0 %v103
    %468 = vmatprep.subr.mxu0 0.0
    %469 = vmatpush2.msra.mxu0 0.0
    %470 = vmatprep.subr.mxu0 0.0
    %471 = vmatpush2.msra.mxu0 0.0
    %472 = vmatprep.subr.mxu0 0.0
    %473 = vmatpush2.msra.mxu0 0.0
    %474 = vmatprep.subr.mxu0 0.0
    %475 = vmatpush2.msra.mxu0 0.0
    %476 = vmatprep.subr.mxu0 0.0
    %477 = vmatpush2.msra.mxu0 0.0
    %478 = vmatprep.subr.mxu0 0.0
    %479 = vmatpush2.msra.mxu0 0.0
    %480 = vmatprep.subr.mxu0 0.0
    %481 = vmatpush2.msra.mxu0 0.0
    %482 = vmatprep.subr.mxu0 0.0
    %483 = vmatpush2.msra.mxu0 0.0
    %484 = vmatprep.subr.mxu0 0.0
    %485 = vmatpush2.msra.mxu0 0.0
    %486 = vmatprep.subr.mxu0 0.0
    %487 = vmatpush2.msra.mxu0 0.0
    %488 = vmatprep.subr.mxu0 0.0
    %489 = vmatpush2.msra.mxu0 0.0
    %490 = vmatprep.subr.mxu0 0.0
    %491 = vmatpush2.msra.mxu0 0.0
    %492 = vmatprep.subr.mxu0 0.0
    %493 = vmatpush2.msra.mxu0 0.0
    %494 = vmatprep.subr.mxu0 0.0
    %495 = vmatpush2.msra.mxu0 0.0
    %496 = vmatprep.subr.mxu0 0.0
    %497 = vmatpush2.msra.mxu0 0.0
    %498 = vmatprep.subr.mxu0 0.0
    %499 = vmatpush2.msra.mxu0 0.0
    %500 = vmatprep.mubr.f32.mxu0 0.0
    %501 = vmatmul.mubr.f32.gmra.mxu0 %v431
    %v502 = vpop.f32.mrf.mxu0
    %v503 = vadd.f32 0.0, %v502
    %v504 = vpop.f32.mrf.mxu0
    %505 = vmatprep.mubr.f32.mxu0 0.0
    %506 = vmatmul.mubr.f32.gmra.mxu0 %v434
    %v507 = vpop.f32.mrf.mxu0
    %v508 = vadd.f32 0.0, %v507
    %v509 = vpop.f32.mrf.mxu0
    %510 = vdwg.mxu0
    %v512 = vsel %vm105, %v97, 0
    %v515 = vsel %vm105, %v98, 0
    %517 = vmatprep.subr.mxu0 0.0
    %518 = vmatpush1.msra.mxu0 0.0
    %519 = vmatprep.subr.mxu0 0.0
    %520 = vmatpush1.msra.mxu0 0.0
    %521 = vmatprep.subr.mxu0 0.0
    %522 = vmatpush1.msra.mxu0 0.0
    %523 = vmatprep.subr.mxu0 0.0
    %524 = vmatpush1.msra.mxu0 0.0
    %525 = vmatprep.subr.mxu0 0.0
    %526 = vmatpush1.msra.mxu0 0.0
    %527 = vmatprep.subr.mxu0 0.0
    %528 = vmatpush1.msra.mxu0 0.0
    %529 = vmatprep.subr.mxu0 0.0
    %530 = vmatpush1.msra.mxu0 0.0
    %531 = vmatprep.subr.mxu0 0.0
    %532 = vmatpush1.msra.mxu0 0.0
    %533 = vmatprep.subr.mxu0 0.0
    %534 = vmatpush1.msra.mxu0 0.0
    %535 = vmatprep.subr.mxu0 0.0
    %536 = vmatpush1.msra.mxu0 0.0
    %537 = vmatprep.subr.mxu0 0.0
    %538 = vmatpush1.msra.mxu0 0.0
    %539 = vmatprep.subr.mxu0 0.0
    %540 = vmatpush1.msra.mxu0 0.0
    %541 = vmatprep.subr.mxu0 0.0
    %542 = vmatpush1.msra.mxu0 0.0
    %543 = vmatprep.subr.mxu0 0.0
    %544 = vmatpush1.msra.mxu0 0.0
    %545 = vmatprep.subr.mxu0 0.0
    %546 = vmatpush1.msra.mxu0 %v104
    %547 = vmatprep.subr.mxu0 0.0
    %548 = vmatpush1.msra.mxu0 %v103
    %549 = vmatprep.subr.mxu0 0.0
    %550 = vmatpush2.msra.mxu0 0.0
    %551 = vmatprep.subr.mxu0 0.0
    %552 = vmatpush2.msra.mxu0 0.0
    %553 = vmatprep.subr.mxu0 0.0
    %554 = vmatpush2.msra.mxu0 0.0
    %555 = vmatprep.subr.mxu0 0.0
    %556 = vmatpush2.msra.mxu0 0.0
    %557 = vmatprep.subr.mxu0 0.0
    %558 = vmatpush2.msra.mxu0 0.0
    %559 = vmatprep.subr.mxu0 0.0
    %560 = vmatpush2.msra.mxu0 0.0
    %561 = vmatprep.subr.mxu0 0.0
    %562 = vmatpush2.msra.mxu0 0.0
    %563 = vmatprep.subr.mxu0 0.0
    %564 = vmatpush2.msra.mxu0 0.0
    %565 = vmatprep.subr.mxu0 0.0
    %566 = vmatpush2.msra.mxu0 0.0
    %567 = vmatprep.subr.mxu0 0.0
    %568 = vmatpush2.msra.mxu0 0.0
    %569 = vmatprep.subr.mxu0 0.0
    %570 = vmatpush2.msra.mxu0 0.0
    %571 = vmatprep.subr.mxu0 0.0
    %572 = vmatpush2.msra.mxu0 0.0
    %573 = vmatprep.subr.mxu0 0.0
    %574 = vmatpush2.msra.mxu0 0.0
    %575 = vmatprep.subr.mxu0 0.0
    %576 = vmatpush2.msra.mxu0 0.0
    %577 = vmatprep.subr.mxu0 0.0
    %578 = vmatpush2.msra.mxu0 0.0
    %579 = vmatprep.subr.mxu0 0.0
    %580 = vmatpush2.msra.mxu0 0.0
    %581 = vmatprep.mubr.f32.mxu0 0.0
    %582 = vmatmul.mubr.f32.gmra.mxu0 %v512
    %v583 = vpop.f32.mrf.mxu0
    %v584 = vadd.f32 0.0, %v583
    %v585 = vpop.f32.mrf.mxu0
    %586 = vmatprep.mubr.f32.mxu0 0.0
    %587 = vmatmul.mubr.f32.gmra.mxu0 %v515
    %v588 = vpop.f32.mrf.mxu0
    %v589 = vadd.f32 0.0, %v588
    %v590 = vpop.f32.mrf.mxu0
    %591 = vdwg.mxu0
    %v593 = vsel %vm105, %v99, 0
    %v596 = vsel %vm105, %v100, 0
    %598 = vmatprep.subr.mxu0 0.0
    %599 = vmatpush1.msra.mxu0 0.0
    %600 = vmatprep.subr.mxu0 0.0
    %601 = vmatpush1.msra.mxu0 0.0
    %602 = vmatprep.subr.mxu0 0.0
    %603 = vmatpush1.msra.mxu0 0.0
    %604 = vmatprep.subr.mxu0 0.0
    %605 = vmatpush1.msra.mxu0 0.0
    %606 = vmatprep.subr.mxu0 0.0
    %607 = vmatpush1.msra.mxu0 0.0
    %608 = vmatprep.subr.mxu0 0.0
    %609 = vmatpush1.msra.mxu0 0.0
    %610 = vmatprep.subr.mxu0 0.0
    %611 = vmatpush1.msra.mxu0 0.0
    %612 = vmatprep.subr.mxu0 0.0
    %613 = vmatpush1.msra.mxu0 0.0
    %614 = vmatprep.subr.mxu0 0.0
    %615 = vmatpush1.msra.mxu0 0.0
    %616 = vmatprep.subr.mxu0 0.0
    %617 = vmatpush1.msra.mxu0 0.0
    %618 = vmatprep.subr.mxu0 0.0
    %619 = vmatpush1.msra.mxu0 0.0
    %620 = vmatprep.subr.mxu0 0.0
    %621 = vmatpush1.msra.mxu0 0.0
    %622 = vmatprep.subr.mxu0 0.0
    %623 = vmatpush1.msra.mxu0 0.0
    %624 = vmatprep.subr.mxu0 0.0
    %625 = vmatpush1.msra.mxu0 0.0
    %626 = vmatprep.subr.mxu0 0.0
    %627 = vmatpush1.msra.mxu0 %v104
    %628 = vmatprep.subr.mxu0 0.0
    %629 = vmatpush1.msra.mxu0 %v103
    %630 = vmatprep.subr.mxu0 0.0
    %631 = vmatpush2.msra.mxu0 0.0
    %632 = vmatprep.subr.mxu0 0.0
    %633 = vmatpush2.msra.mxu0 0.0
    %634 = vmatprep.subr.mxu0 0.0
    %635 = vmatpush2.msra.mxu0 0.0
    %636 = vmatprep.subr.mxu0 0.0
    %637 = vmatpush2.msra.mxu0 0.0
    %638 = vmatprep.subr.mxu0 0.0
    %639 = vmatpush2.msra.mxu0 0.0
    %640 = vmatprep.subr.mxu0 0.0
    %641 = vmatpush2.msra.mxu0 0.0
    %642 = vmatprep.subr.mxu0 0.0
    %643 = vmatpush2.msra.mxu0 0.0
    %644 = vmatprep.subr.mxu0 0.0
    %645 = vmatpush2.msra.mxu0 0.0
    %646 = vmatprep.subr.mxu0 0.0
    %647 = vmatpush2.msra.mxu0 0.0
    %648 = vmatprep.subr.mxu0 0.0
    %649 = vmatpush2.msra.mxu0 0.0
    %650 = vmatprep.subr.mxu0 0.0
    %651 = vmatpush2.msra.mxu0 0.0
    %652 = vmatprep.subr.mxu0 0.0
    %653 = vmatpush2.msra.mxu0 0.0
    %654 = vmatprep.subr.mxu0 0.0
    %655 = vmatpush2.msra.mxu0 0.0
    %656 = vmatprep.subr.mxu0 0.0
    %657 = vmatpush2.msra.mxu0 0.0
    %658 = vmatprep.subr.mxu0 0.0
    %659 = vmatpush2.msra.mxu0 0.0
    %660 = vmatprep.subr.mxu0 0.0
    %661 = vmatpush2.msra.mxu0 0.0
    %662 = vmatprep.mubr.f32.mxu0 0.0
    %663 = vmatmul.mubr.f32.gmra.mxu0 %v593
    %v664 = vpop.f32.mrf.mxu0
    %v665 = vadd.f32 0.0, %v664
    %v666 = vpop.f32.mrf.mxu0
    %667 = vmatprep.mubr.f32.mxu0 0.0
    %668 = vmatmul.mubr.f32.gmra.mxu0 %v596
    %v669 = vpop.f32.mrf.mxu0
    %v670 = vadd.f32 0.0, %v669
    %v671 = vpop.f32.mrf.mxu0
    %672 = vdwg.mxu0
    %v674 = vsel %vm105, %v101, 0
    %v677 = vsel %vm105, %v102, 0
    %679 = vmatprep.subr.mxu0 0.0
    %680 = vmatpush1.msra.mxu0 0.0
    %681 = vmatprep.subr.mxu0 0.0
    %682 = vmatpush1.msra.mxu0 0.0
    %683 = vmatprep.subr.mxu0 0.0
    %684 = vmatpush1.msra.mxu0 0.0
    %685 = vmatprep.subr.mxu0 0.0
    %686 = vmatpush1.msra.mxu0 0.0
    %687 = vmatprep.subr.mxu0 0.0
    %688 = vmatpush1.msra.mxu0 0.0
    %689 = vmatprep.subr.mxu0 0.0
    %690 = vmatpush1.msra.mxu0 0.0
    %691 = vmatprep.subr.mxu0 0.0
    %692 = vmatpush1.msra.mxu0 0.0
    %693 = vmatprep.subr.mxu0 0.0
    %694 = vmatpush1.msra.mxu0 0.0
    %695 = vmatprep.subr.mxu0 0.0
    %696 = vmatpush1.msra.mxu0 0.0
    %697 = vmatprep.subr.mxu0 0.0
    %698 = vmatpush1.msra.mxu0 0.0
    %699 = vmatprep.subr.mxu0 0.0
    %700 = vmatpush1.msra.mxu0 0.0
    %701 = vmatprep.subr.mxu0 0.0
    %702 = vmatpush1.msra.mxu0 0.0
    %703 = vmatprep.subr.mxu0 0.0
    %704 = vmatpush1.msra.mxu0 0.0
    %705 = vmatprep.subr.mxu0 0.0
    %706 = vmatpush1.msra.mxu0 0.0
    %707 = vmatprep.subr.mxu0 0.0
    %708 = vmatpush1.msra.mxu0 %v104
    %709 = vmatprep.subr.mxu0 0.0
    %710 = vmatpush1.msra.mxu0 %v103
    %711 = vmatprep.subr.mxu0 0.0
    %712 = vmatpush2.msra.mxu0 0.0
    %713 = vmatprep.subr.mxu0 0.0
    %714 = vmatpush2.msra.mxu0 0.0
    %715 = vmatprep.subr.mxu0 0.0
    %716 = vmatpush2.msra.mxu0 0.0
    %717 = vmatprep.subr.mxu0 0.0
    %718 = vmatpush2.msra.mxu0 0.0
    %719 = vmatprep.subr.mxu0 0.0
    %720 = vmatpush2.msra.mxu0 0.0
    %721 = vmatprep.subr.mxu0 0.0
    %722 = vmatpush2.msra.mxu0 0.0
    %723 = vmatprep.subr.mxu0 0.0
    %724 = vmatpush2.msra.mxu0 0.0
    %725 = vmatprep.subr.mxu0 0.0
    %726 = vmatpush2.msra.mxu0 0.0
    %727 = vmatprep.subr.mxu0 0.0
    %728 = vmatpush2.msra.mxu0 0.0
    %729 = vmatprep.subr.mxu0 0.0
    %730 = vmatpush2.msra.mxu0 0.0
    %731 = vmatprep.subr.mxu0 0.0
    %732 = vmatpush2.msra.mxu0 0.0
    %733 = vmatprep.subr.mxu0 0.0
    %734 = vmatpush2.msra.mxu0 0.0
    %735 = vmatprep.subr.mxu0 0.0
    %736 = vmatpush2.msra.mxu0 0.0
    %737 = vmatprep.subr.mxu0 0.0
    %738 = vmatpush2.msra.mxu0 0.0
    %739 = vmatprep.subr.mxu0 0.0
    %740 = vmatpush2.msra.mxu0 0.0
    %741 = vmatprep.subr.mxu0 0.0
    %742 = vmatpush2.msra.mxu0 0.0
    %743 = vmatprep.mubr.f32.mxu0 0.0
    %744 = vmatmul.mubr.f32.gmra.mxu0 %v674
    %v745 = vpop.f32.mrf.mxu0
    %v746 = vadd.f32 0.0, %v745
    %v747 = vpop.f32.mrf.mxu0
    %748 = vmatprep.mubr.f32.mxu0 0.0
    %749 = vmatmul.mubr.f32.gmra.mxu0 %v677
    %v750 = vpop.f32.mrf.mxu0
    %v751 = vadd.f32 0.0, %v750
    %v752 = vpop.f32.mrf.mxu0
    %753 = vdwg.mxu0
    %v754 = vld [vmem:[#allocation8] sm:$0xff]
    %v755 = vld [vmem:[#allocation8 + $0x8] sm:$0xff]
    %v756 = vld [vmem:[#allocation8 + $0x10] sm:$0xff]
    %v757 = vld [vmem:[#allocation8 + $0x18] sm:$0xff]
    %v759 = vsel %vm105, %v754, 0
    %v762 = vsel %vm105, %v755, 0
    %v765 = vsel %vm105, %v756, 0
    %v768 = vsel %vm105, %v757, 0
    %770 = vmatprep.subr.mxu0 0.0
    %771 = vmatpush1.msra.mxu0 0.0
    %772 = vmatprep.subr.mxu0 0.0
    %773 = vmatpush1.msra.mxu0 0.0
    %774 = vmatprep.subr.mxu0 0.0
    %775 = vmatpush1.msra.mxu0 0.0
    %776 = vmatprep.subr.mxu0 0.0
    %777 = vmatpush1.msra.mxu0 0.0
    %778 = vmatprep.subr.mxu0 0.0
    %779 = vmatpush1.msra.mxu0 0.0
    %780 = vmatprep.subr.mxu0 0.0
    %781 = vmatpush1.msra.mxu0 0.0
    %782 = vmatprep.subr.mxu0 0.0
    %783 = vmatpush1.msra.mxu0 0.0
    %784 = vmatprep.subr.mxu0 0.0
    %785 = vmatpush1.msra.mxu0 0.0
    %786 = vmatprep.subr.mxu0 0.0
    %787 = vmatpush1.msra.mxu0 0.0
    %788 = vmatprep.subr.mxu0 0.0
    %789 = vmatpush1.msra.mxu0 0.0
    %790 = vmatprep.subr.mxu0 0.0
    %791 = vmatpush1.msra.mxu0 0.0
    %792 = vmatprep.subr.mxu0 0.0
    %793 = vmatpush1.msra.mxu0 0.0
    %794 = vmatprep.subr.mxu0 0.0
    %795 = vmatpush1.msra.mxu0 0.0
    %796 = vmatprep.subr.mxu0 0.0
    %797 = vmatpush1.msra.mxu0 0.0
    %798 = vmatprep.subr.mxu0 0.0
    %799 = vmatpush1.msra.mxu0 %v184
    %800 = vmatprep.subr.mxu0 0.0
    %801 = vmatpush1.msra.mxu0 %v179
    %802 = vmatprep.subr.mxu0 0.0
    %803 = vmatpush2.msra.mxu0 0.0
    %804 = vmatprep.subr.mxu0 0.0
    %805 = vmatpush2.msra.mxu0 0.0
    %806 = vmatprep.subr.mxu0 0.0
    %807 = vmatpush2.msra.mxu0 0.0
    %808 = vmatprep.subr.mxu0 0.0
    %809 = vmatpush2.msra.mxu0 0.0
    %810 = vmatprep.subr.mxu0 0.0
    %811 = vmatpush2.msra.mxu0 0.0
    %812 = vmatprep.subr.mxu0 0.0
    %813 = vmatpush2.msra.mxu0 0.0
    %814 = vmatprep.subr.mxu0 0.0
    %815 = vmatpush2.msra.mxu0 0.0
    %816 = vmatprep.subr.mxu0 0.0
    %817 = vmatpush2.msra.mxu0 0.0
    %818 = vmatprep.subr.mxu0 0.0
    %819 = vmatpush2.msra.mxu0 0.0
    %820 = vmatprep.subr.mxu0 0.0
    %821 = vmatpush2.msra.mxu0 0.0
    %822 = vmatprep.subr.mxu0 0.0
    %823 = vmatpush2.msra.mxu0 0.0
    %824 = vmatprep.subr.mxu0 0.0
    %825 = vmatpush2.msra.mxu0 0.0
    %826 = vmatprep.subr.mxu0 0.0
    %827 = vmatpush2.msra.mxu0 0.0
    %828 = vmatprep.subr.mxu0 0.0
    %829 = vmatpush2.msra.mxu0 0.0
    %830 = vmatprep.subr.mxu0 0.0
    %831 = vmatpush2.msra.mxu0 0.0
    %832 = vmatprep.subr.mxu0 0.0
    %833 = vmatpush2.msra.mxu0 0.0
    %834 = vmatprep.mubr.f32.mxu0 0.0
    %835 = vmatmul.mubr.f32.gmra.mxu0 %v759
    %v836 = vpop.f32.mrf.mxu0
    %v837 = vadd.f32 0.0, %v836
    %v838 = vpop.f32.mrf.mxu0
    %839 = vmatprep.mubr.f32.mxu0 0.0
    %840 = vmatmul.mubr.f32.gmra.mxu0 %v762
    %v841 = vpop.f32.mrf.mxu0
    %v842 = vadd.f32 0.0, %v841
    %v843 = vpop.f32.mrf.mxu0
    %844 = vmatprep.mubr.f32.mxu0 0.0
    %845 = vmatmul.mubr.f32.gmra.mxu0 %v765
    %v846 = vpop.f32.mrf.mxu0
    %v847 = vadd.f32 0.0, %v846
    %v848 = vpop.f32.mrf.mxu0
    %849 = vmatprep.mubr.f32.mxu0 0.0
    %850 = vmatmul.mubr.f32.gmra.mxu0 %v768
    %v851 = vpop.f32.mrf.mxu0
    %v852 = vadd.f32 0.0, %v851
    %v853 = vpop.f32.mrf.mxu0
    %854 = vdwg.mxu0
    %855 = vmatprep.subr.mxu0 0.0
    %856 = vmatpush1.msra.mxu0 0.0
    %857 = vmatprep.subr.mxu0 0.0
    %858 = vmatpush1.msra.mxu0 0.0
    %859 = vmatprep.subr.mxu0 0.0
    %860 = vmatpush1.msra.mxu0 0.0
    %861 = vmatprep.subr.mxu0 0.0
    %862 = vmatpush1.msra.mxu0 0.0
    %863 = vmatprep.subr.mxu0 0.0
    %864 = vmatpush1.msra.mxu0 0.0
    %865 = vmatprep.subr.mxu0 0.0
    %866 = vmatpush1.msra.mxu0 0.0
    %867 = vmatprep.subr.mxu0 0.0
    %868 = vmatpush1.msra.mxu0 0.0
    %869 = vmatprep.subr.mxu0 0.0
    %870 = vmatpush1.msra.mxu0 0.0
    %871 = vmatprep.subr.mxu0 0.0
    %872 = vmatpush1.msra.mxu0 0.0
    %873 = vmatprep.subr.mxu0 0.0
    %874 = vmatpush1.msra.mxu0 0.0
    %875 = vmatprep.subr.mxu0 0.0
    %876 = vmatpush1.msra.mxu0 0.0
    %877 = vmatprep.subr.mxu0 0.0
    %878 = vmatpush1.msra.mxu0 0.0
    %879 = vmatprep.subr.mxu0 0.0
    %880 = vmatpush1.msra.mxu0 0.0
    %881 = vmatprep.subr.mxu0 0.0
    %882 = vmatpush1.msra.mxu0 0.0
    %883 = vmatprep.subr.mxu0 0.0
    %884 = vmatpush1.msra.mxu0 %v265
    %885 = vmatprep.subr.mxu0 0.0
    %886 = vmatpush1.msra.mxu0 %v260
    %887 = vmatprep.subr.mxu0 0.0
    %888 = vmatpush2.msra.mxu0 0.0
    %889 = vmatprep.subr.mxu0 0.0
    %890 = vmatpush2.msra.mxu0 0.0
    %891 = vmatprep.subr.mxu0 0.0
    %892 = vmatpush2.msra.mxu0 0.0
    %893 = vmatprep.subr.mxu0 0.0
    %894 = vmatpush2.msra.mxu0 0.0
    %895 = vmatprep.subr.mxu0 0.0
    %896 = vmatpush2.msra.mxu0 0.0
    %897 = vmatprep.subr.mxu0 0.0
    %898 = vmatpush2.msra.mxu0 0.0
    %899 = vmatprep.subr.mxu0 0.0
    %900 = vmatpush2.msra.mxu0 0.0
    %901 = vmatprep.subr.mxu0 0.0
    %902 = vmatpush2.msra.mxu0 0.0
    %903 = vmatprep.subr.mxu0 0.0
    %904 = vmatpush2.msra.mxu0 0.0
    %905 = vmatprep.subr.mxu0 0.0
    %906 = vmatpush2.msra.mxu0 0.0
    %907 = vmatprep.subr.mxu0 0.0
    %908 = vmatpush2.msra.mxu0 0.0
    %909 = vmatprep.subr.mxu0 0.0
    %910 = vmatpush2.msra.mxu0 0.0
    %911 = vmatprep.subr.mxu0 0.0
    %912 = vmatpush2.msra.mxu0 0.0
    %913 = vmatprep.subr.mxu0 0.0
    %914 = vmatpush2.msra.mxu0 0.0
    %915 = vmatprep.subr.mxu0 0.0
    %916 = vmatpush2.msra.mxu0 0.0
    %917 = vmatprep.subr.mxu0 0.0
    %918 = vmatpush2.msra.mxu0 0.0
    %919 = vmatprep.mubr.f32.mxu0 0.0
    %920 = vmatmul.mubr.f32.gmra.mxu0 %v759
    %v921 = vpop.f32.mrf.mxu0
    %v922 = vadd.f32 0.0, %v921
    %v923 = vpop.f32.mrf.mxu0
    %924 = vmatprep.mubr.f32.mxu0 0.0
    %925 = vmatmul.mubr.f32.gmra.mxu0 %v762
    %v926 = vpop.f32.mrf.mxu0
    %v927 = vadd.f32 0.0, %v926
    %v928 = vpop.f32.mrf.mxu0
    %929 = vmatprep.mubr.f32.mxu0 0.0
    %930 = vmatmul.mubr.f32.gmra.mxu0 %v765
    %v931 = vpop.f32.mrf.mxu0
    %v932 = vadd.f32 0.0, %v931
    %v933 = vpop.f32.mrf.mxu0
    %934 = vmatprep.mubr.f32.mxu0 0.0
    %935 = vmatmul.mubr.f32.gmra.mxu0 %v768
    %v936 = vpop.f32.mrf.mxu0
    %v937 = vadd.f32 0.0, %v936
    %v938 = vpop.f32.mrf.mxu0
    %939 = vdwg.mxu0
    %940 = vmatprep.subr.mxu0 0.0
    %941 = vmatpush1.msra.mxu0 0.0
    %942 = vmatprep.subr.mxu0 0.0
    %943 = vmatpush1.msra.mxu0 0.0
    %944 = vmatprep.subr.mxu0 0.0
    %945 = vmatpush1.msra.mxu0 0.0
    %946 = vmatprep.subr.mxu0 0.0
    %947 = vmatpush1.msra.mxu0 0.0
    %948 = vmatprep.subr.mxu0 0.0
    %949 = vmatpush1.msra.mxu0 0.0
    %950 = vmatprep.subr.mxu0 0.0
    %951 = vmatpush1.msra.mxu0 0.0
    %952 = vmatprep.subr.mxu0 0.0
    %953 = vmatpush1.msra.mxu0 0.0
    %954 = vmatprep.subr.mxu0 0.0
    %955 = vmatpush1.msra.mxu0 0.0
    %956 = vmatprep.subr.mxu0 0.0
    %957 = vmatpush1.msra.mxu0 0.0
    %958 = vmatprep.subr.mxu0 0.0
    %959 = vmatpush1.msra.mxu0 0.0
    %960 = vmatprep.subr.mxu0 0.0
    %961 = vmatpush1.msra.mxu0 0.0
    %962 = vmatprep.subr.mxu0 0.0
    %963 = vmatpush1.msra.mxu0 0.0
    %964 = vmatprep.subr.mxu0 0.0
    %965 = vmatpush1.msra.mxu0 0.0
    %966 = vmatprep.subr.mxu0 0.0
    %967 = vmatpush1.msra.mxu0 0.0
    %968 = vmatprep.subr.mxu0 0.0
    %969 = vmatpush1.msra.mxu0 %v346
    %970 = vmatprep.subr.mxu0 0.0
    %971 = vmatpush1.msra.mxu0 %v341
    %972 = vmatprep.subr.mxu0 0.0
    %973 = vmatpush2.msra.mxu0 0.0
    %974 = vmatprep.subr.mxu0 0.0
    %975 = vmatpush2.msra.mxu0 0.0
    %976 = vmatprep.subr.mxu0 0.0
    %977 = vmatpush2.msra.mxu0 0.0
    %978 = vmatprep.subr.mxu0 0.0
    %979 = vmatpush2.msra.mxu0 0.0
    %980 = vmatprep.subr.mxu0 0.0
    %981 = vmatpush2.msra.mxu0 0.0
    %982 = vmatprep.subr.mxu0 0.0
    %983 = vmatpush2.msra.mxu0 0.0
    %984 = vmatprep.subr.mxu0 0.0
    %985 = vmatpush2.msra.mxu0 0.0
    %986 = vmatprep.subr.mxu0 0.0
    %987 = vmatpush2.msra.mxu0 0.0
    %988 = vmatprep.subr.mxu0 0.0
    %989 = vmatpush2.msra.mxu0 0.0
    %990 = vmatprep.subr.mxu0 0.0
    %991 = vmatpush2.msra.mxu0 0.0
    %992 = vmatprep.subr.mxu0 0.0
    %993 = vmatpush2.msra.mxu0 0.0
    %994 = vmatprep.subr.mxu0 0.0
    %995 = vmatpush2.msra.mxu0 0.0
    %996 = vmatprep.subr.mxu0 0.0
    %997 = vmatpush2.msra.mxu0 0.0
    %998 = vmatprep.subr.mxu0 0.0
    %999 = vmatpush2.msra.mxu0 0.0
    %1000 = vmatprep.subr.mxu0 0.0
    %1001 = vmatpush2.msra.mxu0 0.0
    %1002 = vmatprep.subr.mxu0 0.0
    %1003 = vmatpush2.msra.mxu0 0.0
    %1004 = vmatprep.mubr.f32.mxu0 0.0
    %1005 = vmatmul.mubr.f32.gmra.mxu0 %v759
    %v1006 = vpop.f32.mrf.mxu0
    %v1007 = vadd.f32 0.0, %v1006
    %v1008 = vpop.f32.mrf.mxu0
    %1009 = vmatprep.mubr.f32.mxu0 0.0
    %1010 = vmatmul.mubr.f32.gmra.mxu0 %v762
    %v1011 = vpop.f32.mrf.mxu0
    %v1012 = vadd.f32 0.0, %v1011
    %v1013 = vpop.f32.mrf.mxu0
    %1014 = vmatprep.mubr.f32.mxu0 0.0
    %1015 = vmatmul.mubr.f32.gmra.mxu0 %v765
    %v1016 = vpop.f32.mrf.mxu0
    %v1017 = vadd.f32 0.0, %v1016
    %v1018 = vpop.f32.mrf.mxu0
    %1019 = vmatprep.mubr.f32.mxu0 0.0
    %1020 = vmatmul.mubr.f32.gmra.mxu0 %v768
    %v1021 = vpop.f32.mrf.mxu0
    %v1022 = vadd.f32 0.0, %v1021
    %v1023 = vpop.f32.mrf.mxu0
    %1024 = vdwg.mxu0
    %1025 = vmatprep.subr.mxu0 0.0
    %1026 = vmatpush1.msra.mxu0 0.0
    %1027 = vmatprep.subr.mxu0 0.0
    %1028 = vmatpush1.msra.mxu0 0.0
    %1029 = vmatprep.subr.mxu0 0.0
    %1030 = vmatpush1.msra.mxu0 0.0
    %1031 = vmatprep.subr.mxu0 0.0
    %1032 = vmatpush1.msra.mxu0 0.0
    %1033 = vmatprep.subr.mxu0 0.0
    %1034 = vmatpush1.msra.mxu0 0.0
    %1035 = vmatprep.subr.mxu0 0.0
    %1036 = vmatpush1.msra.mxu0 0.0
    %1037 = vmatprep.subr.mxu0 0.0
    %1038 = vmatpush1.msra.mxu0 0.0
    %1039 = vmatprep.subr.mxu0 0.0
    %1040 = vmatpush1.msra.mxu0 0.0
    %1041 = vmatprep.subr.mxu0 0.0
    %1042 = vmatpush1.msra.mxu0 0.0
    %1043 = vmatprep.subr.mxu0 0.0
    %1044 = vmatpush1.msra.mxu0 0.0
    %1045 = vmatprep.subr.mxu0 0.0
    %1046 = vmatpush1.msra.mxu0 0.0
    %1047 = vmatprep.subr.mxu0 0.0
    %1048 = vmatpush1.msra.mxu0 0.0
    %1049 = vmatprep.subr.mxu0 0.0
    %1050 = vmatpush1.msra.mxu0 0.0
    %1051 = vmatprep.subr.mxu0 0.0
    %1052 = vmatpush1.msra.mxu0 0.0
    %1053 = vmatprep.subr.mxu0 0.0
    %1054 = vmatpush1.msra.mxu0 %v427
    %1055 = vmatprep.subr.mxu0 0.0
    %1056 = vmatpush1.msra.mxu0 %v422
    %1057 = vmatprep.subr.mxu0 0.0
    %1058 = vmatpush2.msra.mxu0 0.0
    %1059 = vmatprep.subr.mxu0 0.0
    %1060 = vmatpush2.msra.mxu0 0.0
    %1061 = vmatprep.subr.mxu0 0.0
    %1062 = vmatpush2.msra.mxu0 0.0
    %1063 = vmatprep.subr.mxu0 0.0
    %1064 = vmatpush2.msra.mxu0 0.0
    %1065 = vmatprep.subr.mxu0 0.0
    %1066 = vmatpush2.msra.mxu0 0.0
    %1067 = vmatprep.subr.mxu0 0.0
    %1068 = vmatpush2.msra.mxu0 0.0
    %1069 = vmatprep.subr.mxu0 0.0
    %1070 = vmatpush2.msra.mxu0 0.0
    %1071 = vmatprep.subr.mxu0 0.0
    %1072 = vmatpush2.msra.mxu0 0.0
    %1073 = vmatprep.subr.mxu0 0.0
    %1074 = vmatpush2.msra.mxu0 0.0
    %1075 = vmatprep.subr.mxu0 0.0
    %1076 = vmatpush2.msra.mxu0 0.0
    %1077 = vmatprep.subr.mxu0 0.0
    %1078 = vmatpush2.msra.mxu0 0.0
    %1079 = vmatprep.subr.mxu0 0.0
    %1080 = vmatpush2.msra.mxu0 0.0
    %1081 = vmatprep.subr.mxu0 0.0
    %1082 = vmatpush2.msra.mxu0 0.0
    %1083 = vmatprep.subr.mxu0 0.0
    %1084 = vmatpush2.msra.mxu0 0.0
    %1085 = vmatprep.subr.mxu0 0.0
    %1086 = vmatpush2.msra.mxu0 0.0
    %1087 = vmatprep.subr.mxu0 0.0
    %1088 = vmatpush2.msra.mxu0 0.0
    %1089 = vmatprep.mubr.f32.mxu0 0.0
    %1090 = vmatmul.mubr.f32.gmra.mxu0 %v759
    %v1091 = vpop.f32.mrf.mxu0
    %v1092 = vadd.f32 0.0, %v1091
    %v1093 = vpop.f32.mrf.mxu0
    %1094 = vmatprep.mubr.f32.mxu0 0.0
    %1095 = vmatmul.mubr.f32.gmra.mxu0 %v762
    %v1096 = vpop.f32.mrf.mxu0
    %v1097 = vadd.f32 0.0, %v1096
    %v1098 = vpop.f32.mrf.mxu0
    %1099 = vmatprep.mubr.f32.mxu0 0.0
    %1100 = vmatmul.mubr.f32.gmra.mxu0 %v765
    %v1101 = vpop.f32.mrf.mxu0
    %v1102 = vadd.f32 0.0, %v1101
    %v1103 = vpop.f32.mrf.mxu0
    %1104 = vmatprep.mubr.f32.mxu0 0.0
    %1105 = vmatmul.mubr.f32.gmra.mxu0 %v768
    %v1106 = vpop.f32.mrf.mxu0
    %v1107 = vadd.f32 0.0, %v1106
    %v1108 = vpop.f32.mrf.mxu0
    %1109 = vdwg.mxu0
    %1110 = vmatprep.subr.mxu0 0.0
    %1111 = vmatpush1.msra.mxu0 0.0
    %1112 = vmatprep.subr.mxu0 0.0
    %1113 = vmatpush1.msra.mxu0 0.0
    %1114 = vmatprep.subr.mxu0 0.0
    %1115 = vmatpush1.msra.mxu0 0.0
    %1116 = vmatprep.subr.mxu0 0.0
    %1117 = vmatpush1.msra.mxu0 0.0
    %1118 = vmatprep.subr.mxu0 0.0
    %1119 = vmatpush1.msra.mxu0 0.0
    %1120 = vmatprep.subr.mxu0 0.0
    %1121 = vmatpush1.msra.mxu0 0.0
    %1122 = vmatprep.subr.mxu0 0.0
    %1123 = vmatpush1.msra.mxu0 0.0
    %1124 = vmatprep.subr.mxu0 0.0
    %1125 = vmatpush1.msra.mxu0 0.0
    %1126 = vmatprep.subr.mxu0 0.0
    %1127 = vmatpush1.msra.mxu0 0.0
    %1128 = vmatprep.subr.mxu0 0.0
    %1129 = vmatpush1.msra.mxu0 0.0
    %1130 = vmatprep.subr.mxu0 0.0
    %1131 = vmatpush1.msra.mxu0 0.0
    %1132 = vmatprep.subr.mxu0 0.0
    %1133 = vmatpush1.msra.mxu0 0.0
    %1134 = vmatprep.subr.mxu0 0.0
    %1135 = vmatpush1.msra.mxu0 0.0
    %1136 = vmatprep.subr.mxu0 0.0
    %1137 = vmatpush1.msra.mxu0 0.0
    %1138 = vmatprep.subr.mxu0 0.0
    %1139 = vmatpush1.msra.mxu0 %v508
    %1140 = vmatprep.subr.mxu0 0.0
    %1141 = vmatpush1.msra.mxu0 %v503
    %1142 = vmatprep.subr.mxu0 0.0
    %1143 = vmatpush2.msra.mxu0 0.0
    %1144 = vmatprep.subr.mxu0 0.0
    %1145 = vmatpush2.msra.mxu0 0.0
    %1146 = vmatprep.subr.mxu0 0.0
    %1147 = vmatpush2.msra.mxu0 0.0
    %1148 = vmatprep.subr.mxu0 0.0
    %1149 = vmatpush2.msra.mxu0 0.0
    %1150 = vmatprep.subr.mxu0 0.0
    %1151 = vmatpush2.msra.mxu0 0.0
    %1152 = vmatprep.subr.mxu0 0.0
    %1153 = vmatpush2.msra.mxu0 0.0
    %1154 = vmatprep.subr.mxu0 0.0
    %1155 = vmatpush2.msra.mxu0 0.0
    %1156 = vmatprep.subr.mxu0 0.0
    %1157 = vmatpush2.msra.mxu0 0.0
    %1158 = vmatprep.subr.mxu0 0.0
    %1159 = vmatpush2.msra.mxu0 0.0
    %1160 = vmatprep.subr.mxu0 0.0
    %1161 = vmatpush2.msra.mxu0 0.0
    %1162 = vmatprep.subr.mxu0 0.0
    %1163 = vmatpush2.msra.mxu0 0.0
    %1164 = vmatprep.subr.mxu0 0.0
    %1165 = vmatpush2.msra.mxu0 0.0
    %1166 = vmatprep.subr.mxu0 0.0
    %1167 = vmatpush2.msra.mxu0 0.0
    %1168 = vmatprep.subr.mxu0 0.0
    %1169 = vmatpush2.msra.mxu0 0.0
    %1170 = vmatprep.subr.mxu0 0.0
    %1171 = vmatpush2.msra.mxu0 0.0
    %1172 = vmatprep.subr.mxu0 0.0
    %1173 = vmatpush2.msra.mxu0 0.0
    %1174 = vmatprep.mubr.f32.mxu0 0.0
    %1175 = vmatmul.mubr.f32.gmra.mxu0 %v759
    %v1176 = vpop.f32.mrf.mxu0
    %v1177 = vadd.f32 0.0, %v1176
    %v1178 = vpop.f32.mrf.mxu0
    %1179 = vmatprep.mubr.f32.mxu0 0.0
    %1180 = vmatmul.mubr.f32.gmra.mxu0 %v762
    %v1181 = vpop.f32.mrf.mxu0
    %v1182 = vadd.f32 0.0, %v1181
    %v1183 = vpop.f32.mrf.mxu0
    %1184 = vmatprep.mubr.f32.mxu0 0.0
    %1185 = vmatmul.mubr.f32.gmra.mxu0 %v765
    %v1186 = vpop.f32.mrf.mxu0
    %v1187 = vadd.f32 0.0, %v1186
    %v1188 = vpop.f32.mrf.mxu0
    %1189 = vmatprep.mubr.f32.mxu0 0.0
    %1190 = vmatmul.mubr.f32.gmra.mxu0 %v768
    %v1191 = vpop.f32.mrf.mxu0
    %v1192 = vadd.f32 0.0, %v1191
    %v1193 = vpop.f32.mrf.mxu0
    %1194 = vdwg.mxu0
    %1195 = vmatprep.subr.mxu0 0.0
    %1196 = vmatpush1.msra.mxu0 0.0
    %1197 = vmatprep.subr.mxu0 0.0
    %1198 = vmatpush1.msra.mxu0 0.0
    %1199 = vmatprep.subr.mxu0 0.0
    %1200 = vmatpush1.msra.mxu0 0.0
    %1201 = vmatprep.subr.mxu0 0.0
    %1202 = vmatpush1.msra.mxu0 0.0
    %1203 = vmatprep.subr.mxu0 0.0
    %1204 = vmatpush1.msra.mxu0 0.0
    %1205 = vmatprep.subr.mxu0 0.0
    %1206 = vmatpush1.msra.mxu0 0.0
    %1207 = vmatprep.subr.mxu0 0.0
    %1208 = vmatpush1.msra.mxu0 0.0
    %1209 = vmatprep.subr.mxu0 0.0
    %1210 = vmatpush1.msra.mxu0 0.0
    %1211 = vmatprep.subr.mxu0 0.0
    %1212 = vmatpush1.msra.mxu0 0.0
    %1213 = vmatprep.subr.mxu0 0.0
    %1214 = vmatpush1.msra.mxu0 0.0
    %1215 = vmatprep.subr.mxu0 0.0
    %1216 = vmatpush1.msra.mxu0 0.0
    %1217 = vmatprep.subr.mxu0 0.0
    %1218 = vmatpush1.msra.mxu0 0.0
    %1219 = vmatprep.subr.mxu0 0.0
    %1220 = vmatpush1.msra.mxu0 0.0
    %1221 = vmatprep.subr.mxu0 0.0
    %1222 = vmatpush1.msra.mxu0 0.0
    %1223 = vmatprep.subr.mxu0 0.0
    %1224 = vmatpush1.msra.mxu0 %v589
    %1225 = vmatprep.subr.mxu0 0.0
    %1226 = vmatpush1.msra.mxu0 %v584
    %1227 = vmatprep.subr.mxu0 0.0
    %1228 = vmatpush2.msra.mxu0 0.0
    %1229 = vmatprep.subr.mxu0 0.0
    %1230 = vmatpush2.msra.mxu0 0.0
    %1231 = vmatprep.subr.mxu0 0.0
    %1232 = vmatpush2.msra.mxu0 0.0
    %1233 = vmatprep.subr.mxu0 0.0
    %1234 = vmatpush2.msra.mxu0 0.0
    %1235 = vmatprep.subr.mxu0 0.0
    %1236 = vmatpush2.msra.mxu0 0.0
    %1237 = vmatprep.subr.mxu0 0.0
    %1238 = vmatpush2.msra.mxu0 0.0
    %1239 = vmatprep.subr.mxu0 0.0
    %1240 = vmatpush2.msra.mxu0 0.0
    %1241 = vmatprep.subr.mxu0 0.0
    %1242 = vmatpush2.msra.mxu0 0.0
    %1243 = vmatprep.subr.mxu0 0.0
    %1244 = vmatpush2.msra.mxu0 0.0
    %1245 = vmatprep.subr.mxu0 0.0
    %1246 = vmatpush2.msra.mxu0 0.0
    %1247 = vmatprep.subr.mxu0 0.0
    %1248 = vmatpush2.msra.mxu0 0.0
    %1249 = vmatprep.subr.mxu0 0.0
    %1250 = vmatpush2.msra.mxu0 0.0
    %1251 = vmatprep.subr.mxu0 0.0
    %1252 = vmatpush2.msra.mxu0 0.0
    %1253 = vmatprep.subr.mxu0 0.0
    %1254 = vmatpush2.msra.mxu0 0.0
    %1255 = vmatprep.subr.mxu0 0.0
    %1256 = vmatpush2.msra.mxu0 0.0
    %1257 = vmatprep.subr.mxu0 0.0
    %1258 = vmatpush2.msra.mxu0 0.0
    %1259 = vmatprep.mubr.f32.mxu0 0.0
    %1260 = vmatmul.mubr.f32.gmra.mxu0 %v759
    %v1261 = vpop.f32.mrf.mxu0
    %v1262 = vadd.f32 0.0, %v1261
    %v1263 = vpop.f32.mrf.mxu0
    %1264 = vmatprep.mubr.f32.mxu0 0.0
    %1265 = vmatmul.mubr.f32.gmra.mxu0 %v762
    %v1266 = vpop.f32.mrf.mxu0
    %v1267 = vadd.f32 0.0, %v1266
    %v1268 = vpop.f32.mrf.mxu0
    %1269 = vmatprep.mubr.f32.mxu0 0.0
    %1270 = vmatmul.mubr.f32.gmra.mxu0 %v765
    %v1271 = vpop.f32.mrf.mxu0
    %v1272 = vadd.f32 0.0, %v1271
    %v1273 = vpop.f32.mrf.mxu0
    %1274 = vmatprep.mubr.f32.mxu0 0.0
    %1275 = vmatmul.mubr.f32.gmra.mxu0 %v768
    %v1276 = vpop.f32.mrf.mxu0
    %v1277 = vadd.f32 0.0, %v1276
    %v1278 = vpop.f32.mrf.mxu0
    %1279 = vdwg.mxu0
    %1280 = vmatprep.subr.mxu0 0.0
    %1281 = vmatpush1.msra.mxu0 0.0
    %1282 = vmatprep.subr.mxu0 0.0
    %1283 = vmatpush1.msra.mxu0 0.0
    %1284 = vmatprep.subr.mxu0 0.0
    %1285 = vmatpush1.msra.mxu0 0.0
    %1286 = vmatprep.subr.mxu0 0.0
    %1287 = vmatpush1.msra.mxu0 0.0
    %1288 = vmatprep.subr.mxu0 0.0
    %1289 = vmatpush1.msra.mxu0 0.0
    %1290 = vmatprep.subr.mxu0 0.0
    %1291 = vmatpush1.msra.mxu0 0.0
    %1292 = vmatprep.subr.mxu0 0.0
    %1293 = vmatpush1.msra.mxu0 0.0
    %1294 = vmatprep.subr.mxu0 0.0
    %1295 = vmatpush1.msra.mxu0 0.0
    %1296 = vmatprep.subr.mxu0 0.0
    %1297 = vmatpush1.msra.mxu0 0.0
    %1298 = vmatprep.subr.mxu0 0.0
    %1299 = vmatpush1.msra.mxu0 0.0
    %1300 = vmatprep.subr.mxu0 0.0
    %1301 = vmatpush1.msra.mxu0 0.0
    %1302 = vmatprep.subr.mxu0 0.0
    %1303 = vmatpush1.msra.mxu0 0.0
    %1304 = vmatprep.subr.mxu0 0.0
    %1305 = vmatpush1.msra.mxu0 0.0
    %1306 = vmatprep.subr.mxu0 0.0
    %1307 = vmatpush1.msra.mxu0 0.0
    %1308 = vmatprep.subr.mxu0 0.0
    %1309 = vmatpush1.msra.mxu0 %v670
    %1310 = vmatprep.subr.mxu0 0.0
    %1311 = vmatpush1.msra.mxu0 %v665
    %1312 = vmatprep.subr.mxu0 0.0
    %1313 = vmatpush2.msra.mxu0 0.0
    %1314 = vmatprep.subr.mxu0 0.0
    %1315 = vmatpush2.msra.mxu0 0.0
    %1316 = vmatprep.subr.mxu0 0.0
    %1317 = vmatpush2.msra.mxu0 0.0
    %1318 = vmatprep.subr.mxu0 0.0
    %1319 = vmatpush2.msra.mxu0 0.0
    %1320 = vmatprep.subr.mxu0 0.0
    %1321 = vmatpush2.msra.mxu0 0.0
    %1322 = vmatprep.subr.mxu0 0.0
    %1323 = vmatpush2.msra.mxu0 0.0
    %1324 = vmatprep.subr.mxu0 0.0
    %1325 = vmatpush2.msra.mxu0 0.0
    %1326 = vmatprep.subr.mxu0 0.0
    %1327 = vmatpush2.msra.mxu0 0.0
    %1328 = vmatprep.subr.mxu0 0.0
    %1329 = vmatpush2.msra.mxu0 0.0
    %1330 = vmatprep.subr.mxu0 0.0
    %1331 = vmatpush2.msra.mxu0 0.0
    %1332 = vmatprep.subr.mxu0 0.0
    %1333 = vmatpush2.msra.mxu0 0.0
    %1334 = vmatprep.subr.mxu0 0.0
    %1335 = vmatpush2.msra.mxu0 0.0
    %1336 = vmatprep.subr.mxu0 0.0
    %1337 = vmatpush2.msra.mxu0 0.0
    %1338 = vmatprep.subr.mxu0 0.0
    %1339 = vmatpush2.msra.mxu0 0.0
    %1340 = vmatprep.subr.mxu0 0.0
    %1341 = vmatpush2.msra.mxu0 0.0
    %1342 = vmatprep.subr.mxu0 0.0
    %1343 = vmatpush2.msra.mxu0 0.0
    %1344 = vmatprep.mubr.f32.mxu0 0.0
    %1345 = vmatmul.mubr.f32.gmra.mxu0 %v759
    %v1346 = vpop.f32.mrf.mxu0
    %v1347 = vadd.f32 0.0, %v1346
    %v1348 = vpop.f32.mrf.mxu0
    %1349 = vmatprep.mubr.f32.mxu0 0.0
    %1350 = vmatmul.mubr.f32.gmra.mxu0 %v762
    %v1351 = vpop.f32.mrf.mxu0
    %v1352 = vadd.f32 0.0, %v1351
    %v1353 = vpop.f32.mrf.mxu0
    %1354 = vmatprep.mubr.f32.mxu0 0.0
    %1355 = vmatmul.mubr.f32.gmra.mxu0 %v765
    %v1356 = vpop.f32.mrf.mxu0
    %v1357 = vadd.f32 0.0, %v1356
    %v1358 = vpop.f32.mrf.mxu0
    %1359 = vmatprep.mubr.f32.mxu0 0.0
    %1360 = vmatmul.mubr.f32.gmra.mxu0 %v768
    %v1361 = vpop.f32.mrf.mxu0
    %v1362 = vadd.f32 0.0, %v1361
    %v1363 = vpop.f32.mrf.mxu0
    %1364 = vdwg.mxu0
    %1365 = vmatprep.subr.mxu0 0.0
    %1366 = vmatpush1.msra.mxu0 0.0
    %1367 = vmatprep.subr.mxu0 0.0
    %1368 = vmatpush1.msra.mxu0 0.0
    %1369 = vmatprep.subr.mxu0 0.0
    %1370 = vmatpush1.msra.mxu0 0.0
    %1371 = vmatprep.subr.mxu0 0.0
    %1372 = vmatpush1.msra.mxu0 0.0
    %1373 = vmatprep.subr.mxu0 0.0
    %1374 = vmatpush1.msra.mxu0 0.0
    %1375 = vmatprep.subr.mxu0 0.0
    %1376 = vmatpush1.msra.mxu0 0.0
    %1377 = vmatprep.subr.mxu0 0.0
    %1378 = vmatpush1.msra.mxu0 0.0
    %1379 = vmatprep.subr.mxu0 0.0
    %1380 = vmatpush1.msra.mxu0 0.0
    %1381 = vmatprep.subr.mxu0 0.0
    %1382 = vmatpush1.msra.mxu0 0.0
    %1383 = vmatprep.subr.mxu0 0.0
    %1384 = vmatpush1.msra.mxu0 0.0
    %1385 = vmatprep.subr.mxu0 0.0
    %1386 = vmatpush1.msra.mxu0 0.0
    %1387 = vmatprep.subr.mxu0 0.0
    %1388 = vmatpush1.msra.mxu0 0.0
    %1389 = vmatprep.subr.mxu0 0.0
    %1390 = vmatpush1.msra.mxu0 0.0
    %1391 = vmatprep.subr.mxu0 0.0
    %1392 = vmatpush1.msra.mxu0 0.0
    %1393 = vmatprep.subr.mxu0 0.0
    %1394 = vmatpush1.msra.mxu0 %v751
    %1395 = vmatprep.subr.mxu0 0.0
    %1396 = vmatpush1.msra.mxu0 %v746
    %1397 = vmatprep.subr.mxu0 0.0
    %1398 = vmatpush2.msra.mxu0 0.0
    %1399 = vmatprep.subr.mxu0 0.0
    %1400 = vmatpush2.msra.mxu0 0.0
    %1401 = vmatprep.subr.mxu0 0.0
    %1402 = vmatpush2.msra.mxu0 0.0
    %1403 = vmatprep.subr.mxu0 0.0
    %1404 = vmatpush2.msra.mxu0 0.0
    %1405 = vmatprep.subr.mxu0 0.0
    %1406 = vmatpush2.msra.mxu0 0.0
    %1407 = vmatprep.subr.mxu0 0.0
    %1408 = vmatpush2.msra.mxu0 0.0
    %1409 = vmatprep.subr.mxu0 0.0
    %1410 = vmatpush2.msra.mxu0 0.0
    %1411 = vmatprep.subr.mxu0 0.0
    %1412 = vmatpush2.msra.mxu0 0.0
    %1413 = vmatprep.subr.mxu0 0.0
    %1414 = vmatpush2.msra.mxu0 0.0
    %1415 = vmatprep.subr.mxu0 0.0
    %1416 = vmatpush2.msra.mxu0 0.0
    %1417 = vmatprep.subr.mxu0 0.0
    %1418 = vmatpush2.msra.mxu0 0.0
    %1419 = vmatprep.subr.mxu0 0.0
    %1420 = vmatpush2.msra.mxu0 0.0
    %1421 = vmatprep.subr.mxu0 0.0
    %1422 = vmatpush2.msra.mxu0 0.0
    %1423 = vmatprep.subr.mxu0 0.0
    %1424 = vmatpush2.msra.mxu0 0.0
    %1425 = vmatprep.subr.mxu0 0.0
    %1426 = vmatpush2.msra.mxu0 0.0
    %1427 = vmatprep.subr.mxu0 0.0
    %1428 = vmatpush2.msra.mxu0 0.0
    %1429 = vmatprep.mubr.f32.mxu0 0.0
    %1430 = vmatmul.mubr.f32.gmra.mxu0 %v759
    %v1431 = vpop.f32.mrf.mxu0
    %v1432 = vadd.f32 0.0, %v1431
    %v1433 = vpop.f32.mrf.mxu0
    %1434 = vmatprep.mubr.f32.mxu0 0.0
    %1435 = vmatmul.mubr.f32.gmra.mxu0 %v762
    %v1436 = vpop.f32.mrf.mxu0
    %v1437 = vadd.f32 0.0, %v1436
    %v1438 = vpop.f32.mrf.mxu0
    %1439 = vmatprep.mubr.f32.mxu0 0.0
    %1440 = vmatmul.mubr.f32.gmra.mxu0 %v765
    %v1441 = vpop.f32.mrf.mxu0
    %v1442 = vadd.f32 0.0, %v1441
    %v1443 = vpop.f32.mrf.mxu0
    %1444 = vmatprep.mubr.f32.mxu0 0.0
    %1445 = vmatmul.mubr.f32.gmra.mxu0 %v768
    %v1446 = vpop.f32.mrf.mxu0
    %v1447 = vadd.f32 0.0, %v1446
    %v1448 = vpop.f32.mrf.mxu0
    %1449 = vdwg.mxu0
    %s1450 = sld [smem:[#allocation9]]
    %v1451 = vstv %s1450
    %v1452 = vmul.f32 %v1451, %v837
    %v1453 = vmul.f32 %v1451, %v842
    %v1454 = vmul.f32 %v1451, %v847
    %v1455 = vmul.f32 %v1451, %v852
    %s1456 = sld [smem:[#allocation9 + $0x1]]
    %v1457 = vstv %s1456
    %v1458 = vmul.f32 %v1457, %v922
    %v1459 = vmul.f32 %v1457, %v927
    %v1460 = vmul.f32 %v1457, %v932
    %v1461 = vmul.f32 %v1457, %v937
    %v1462 = vadd.f32 %v1452, %v1458
    %v1463 = vadd.f32 %v1453, %v1459
    %v1464 = vadd.f32 %v1454, %v1460
    %v1465 = vadd.f32 %v1455, %v1461
    %s1466 = sld [smem:[#allocation9 + $0x2]]
    %v1467 = vstv %s1466
    %v1468 = vmul.f32 %v1467, %v1007
    %v1469 = vmul.f32 %v1467, %v1012
    %v1470 = vmul.f32 %v1467, %v1017
    %v1471 = vmul.f32 %v1467, %v1022
    %v1472 = vadd.f32 %v1462, %v1468
    %v1473 = vadd.f32 %v1463, %v1469
    %v1474 = vadd.f32 %v1464, %v1470
    %v1475 = vadd.f32 %v1465, %v1471
    %s1476 = sld [smem:[#allocation9 + $0x3]]
    %v1477 = vstv %s1476
    %v1478 = vmul.f32 %v1477, %v1092
    %v1479 = vmul.f32 %v1477, %v1097
    %v1480 = vmul.f32 %v1477, %v1102
    %v1481 = vmul.f32 %v1477, %v1107
    %v1482 = vadd.f32 %v1472, %v1478
    %v1483 = vadd.f32 %v1473, %v1479
    %v1484 = vadd.f32 %v1474, %v1480
    %v1485 = vadd.f32 %v1475, %v1481
    %s1486 = sld [smem:[#allocation10]]
    %v1487 = vstv %s1486
    %v1488 = vadd.f32 %v1482, %v1487
    %v1489 = vadd.f32 %v1483, %v1487
    %v1490 = vadd.f32 %v1484, %v1487
    %v1491 = vadd.f32 %v1485, %v1487
    %v1492 = vmax.f32 %v1488, 0.0
    %v1493 = vmax.f32 %v1489, 0.0
    %v1494 = vmax.f32 %v1490, 0.0
    %v1495 = vmax.f32 %v1491, 0.0
    %vm1496 = vcmask 261120
    %1497 = vst.msk [vmem:[#allocation12] sm:$0xff] %vm1496, %v1492
    %1498 = vst.msk [vmem:[#allocation12 + $0x8] sm:$0xff] %vm1496, %v1493
    %1499 = vst.msk [vmem:[#allocation12 + $0x10] sm:$0xff] %vm1496, %v1494
    %1500 = vst.msk [vmem:[#allocation12 + $0x18] sm:$0xff] %vm1496, %v1495
    %s1501 = sld [smem:[#allocation9 + $0x80]]
    %v1502 = vstv %s1501
    %v1503 = vmul.f32 %v1502, %v837
    %v1504 = vmul.f32 %v1502, %v842
    %v1505 = vmul.f32 %v1502, %v847
    %v1506 = vmul.f32 %v1502, %v852
    %s1507 = sld [smem:[#allocation9 + $0x81]]
    %v1508 = vstv %s1507
    %v1509 = vmul.f32 %v1508, %v922
    %v1510 = vmul.f32 %v1508, %v927
    %v1511 = vmul.f32 %v1508, %v932
    %v1512 = vmul.f32 %v1508, %v937
    %v1513 = vadd.f32 %v1503, %v1509
    %v1514 = vadd.f32 %v1504, %v1510
    %v1515 = vadd.f32 %v1505, %v1511
    %v1516 = vadd.f32 %v1506, %v1512
    %s1517 = sld [smem:[#allocation9 + $0x82]]
    %v1518 = vstv %s1517
    %v1519 = vmul.f32 %v1518, %v1007
    %v1520 = vmul.f32 %v1518, %v1012
    %v1521 = vmul.f32 %v1518, %v1017
    %v1522 = vmul.f32 %v1518, %v1022
    %v1523 = vadd.f32 %v1513, %v1519
    %v1524 = vadd.f32 %v1514, %v1520
    %v1525 = vadd.f32 %v1515, %v1521
    %v1526 = vadd.f32 %v1516, %v1522
    %s1527 = sld [smem:[#allocation9 + $0x83]]
    %v1528 = vstv %s1527
    %v1529 = vmul.f32 %v1528, %v1092
    %v1530 = vmul.f32 %v1528, %v1097
    %v1531 = vmul.f32 %v1528, %v1102
    %v1532 = vmul.f32 %v1528, %v1107
    %v1533 = vadd.f32 %v1523, %v1529
    %v1534 = vadd.f32 %v1524, %v1530
    %v1535 = vadd.f32 %v1525, %v1531
    %v1536 = vadd.f32 %v1526, %v1532
    %s1537 = sld [smem:[#allocation10 + $0x1]]
    %v1538 = vstv %s1537
    %v1539 = vadd.f32 %v1533, %v1538
    %v1540 = vadd.f32 %v1534, %v1538
    %v1541 = vadd.f32 %v1535, %v1538
    %v1542 = vadd.f32 %v1536, %v1538
    %v1543 = vmax.f32 %v1539, 0.0
    %v1544 = vmax.f32 %v1540, 0.0
    %v1545 = vmax.f32 %v1541, 0.0
    %v1546 = vmax.f32 %v1542, 0.0
    %s1547 = scalar_lea.vmem [#allocation12], 32
    %1548 = vst.msk [vmem:[%s1547] sm:$0xff] %vm1496, %v1543
    %1549 = vst.msk [vmem:[%s1547 + $0x8] sm:$0xff] %vm1496, %v1544
    %1550 = vst.msk [vmem:[%s1547 + $0x10] sm:$0xff] %vm1496, %v1545
    %1551 = vst.msk [vmem:[%s1547 + $0x18] sm:$0xff] %vm1496, %v1546
    %s1552 = sld [smem:[#allocation9]]
    %v1553 = vstv %s1552
    %v1554 = vmul.f32 %v1553, %v1177
    %v1555 = vmul.f32 %v1553, %v1182
    %v1556 = vmul.f32 %v1553, %v1187
    %v1557 = vmul.f32 %v1553, %v1192
    %s1558 = sld [smem:[#allocation9 + $0x1]]
    %v1559 = vstv %s1558
    %v1560 = vmul.f32 %v1559, %v1262
    %v1561 = vmul.f32 %v1559, %v1267
    %v1562 = vmul.f32 %v1559, %v1272
    %v1563 = vmul.f32 %v1559, %v1277
    %v1564 = vadd.f32 %v1554, %v1560
    %v1565 = vadd.f32 %v1555, %v1561
    %v1566 = vadd.f32 %v1556, %v1562
    %v1567 = vadd.f32 %v1557, %v1563
    %s1568 = sld [smem:[#allocation9 + $0x2]]
    %v1569 = vstv %s1568
    %v1570 = vmul.f32 %v1569, %v1347
    %v1571 = vmul.f32 %v1569, %v1352
    %v1572 = vmul.f32 %v1569, %v1357
    %v1573 = vmul.f32 %v1569, %v1362
    %v1574 = vadd.f32 %v1564, %v1570
    %v1575 = vadd.f32 %v1565, %v1571
    %v1576 = vadd.f32 %v1566, %v1572
    %v1577 = vadd.f32 %v1567, %v1573
    %s1578 = sld [smem:[#allocation9 + $0x3]]
    %v1579 = vstv %s1578
    %v1580 = vmul.f32 %v1579, %v1432
    %v1581 = vmul.f32 %v1579, %v1437
    %v1582 = vmul.f32 %v1579, %v1442
    %v1583 = vmul.f32 %v1579, %v1447
    %v1584 = vadd.f32 %v1574, %v1580
    %v1585 = vadd.f32 %v1575, %v1581
    %v1586 = vadd.f32 %v1576, %v1582
    %v1587 = vadd.f32 %v1577, %v1583
    %s1588 = sld [smem:[#allocation10]]
    %v1589 = vstv %s1588
    %v1590 = vadd.f32 %v1584, %v1589
    %v1591 = vadd.f32 %v1585, %v1589
    %v1592 = vadd.f32 %v1586, %v1589
    %v1593 = vadd.f32 %v1587, %v1589
    %v1594 = vmax.f32 %v1590, 0.0
    %v1595 = vmax.f32 %v1591, 0.0
    %v1596 = vmax.f32 %v1592, 0.0
    %v1597 = vmax.f32 %v1593, 0.0
    %s1598 = scalar_lea.vmem [#allocation12], 64
    %1599 = vst.msk [vmem:[%s1598] sm:$0xff] %vm1496, %v1594
    %1600 = vst.msk [vmem:[%s1598 + $0x8] sm:$0xff] %vm1496, %v1595
    %1601 = vst.msk [vmem:[%s1598 + $0x10] sm:$0xff] %vm1496, %v1596
    %1602 = vst.msk [vmem:[%s1598 + $0x18] sm:$0xff] %vm1496, %v1597
    %s1603 = sld [smem:[#allocation9 + $0x80]]
    %v1604 = vstv %s1603
    %v1605 = vmul.f32 %v1604, %v1177
    %v1606 = vmul.f32 %v1604, %v1182
    %v1607 = vmul.f32 %v1604, %v1187
    %v1608 = vmul.f32 %v1604, %v1192
    %s1609 = sld [smem:[#allocation9 + $0x81]]
    %v1610 = vstv %s1609
    %v1611 = vmul.f32 %v1610, %v1262
    %v1612 = vmul.f32 %v1610, %v1267
    %v1613 = vmul.f32 %v1610, %v1272
    %v1614 = vmul.f32 %v1610, %v1277
    %v1615 = vadd.f32 %v1605, %v1611
    %v1616 = vadd.f32 %v1606, %v1612
    %v1617 = vadd.f32 %v1607, %v1613
    %v1618 = vadd.f32 %v1608, %v1614
    %s1619 = sld [smem:[#allocation9 + $0x82]]
    %v1620 = vstv %s1619
    %v1621 = vmul.f32 %v1620, %v1347
    %v1622 = vmul.f32 %v1620, %v1352
    %v1623 = vmul.f32 %v1620, %v1357
    %v1624 = vmul.f32 %v1620, %v1362
    %v1625 = vadd.f32 %v1615, %v1621
    %v1626 = vadd.f32 %v1616, %v1622
    %v1627 = vadd.f32 %v1617, %v1623
    %v1628 = vadd.f32 %v1618, %v1624
    %s1629 = sld [smem:[#allocation9 + $0x83]]
    %v1630 = vstv %s1629
    %v1631 = vmul.f32 %v1630, %v1432
    %v1632 = vmul.f32 %v1630, %v1437
    %v1633 = vmul.f32 %v1630, %v1442
    %v1634 = vmul.f32 %v1630, %v1447
    %v1635 = vadd.f32 %v1625, %v1631
    %v1636 = vadd.f32 %v1626, %v1632
    %v1637 = vadd.f32 %v1627, %v1633
    %v1638 = vadd.f32 %v1628, %v1634
    %s1639 = sld [smem:[#allocation10 + $0x1]]
    %v1640 = vstv %s1639
    %v1641 = vadd.f32 %v1635, %v1640
    %v1642 = vadd.f32 %v1636, %v1640
    %v1643 = vadd.f32 %v1637, %v1640
    %v1644 = vadd.f32 %v1638, %v1640
    %v1645 = vmax.f32 %v1641, 0.0
    %v1646 = vmax.f32 %v1642, 0.0
    %v1647 = vmax.f32 %v1643, 0.0
    %v1648 = vmax.f32 %v1644, 0.0
    %s1649 = scalar_lea.vmem [#allocation12], 96
    %1650 = vst.msk [vmem:[%s1649] sm:$0xff] %vm1496, %v1645
    %1651 = vst.msk [vmem:[%s1649 + $0x8] sm:$0xff] %vm1496, %v1646
    %1652 = vst.msk [vmem:[%s1649 + $0x10] sm:$0xff] %vm1496, %v1647
    %1653 = vst.msk [vmem:[%s1649 + $0x18] sm:$0xff] %vm1496, %v1648
    // Predicated region
    $region42: #{dcan_upsample_interp_block.1} parent=1 // pred_check
      _
    $region43: #{dcan_upsample_interp_block.1} parent=1 // pred_check_branch
      %1655 = sbr.rel (0) target = $region45
    $region44: #{dcan_upsample_interp_block.1} parent=1 // pred_region
      %s1657 = ssub.s32 2048, 2048
      %1658 = vsyncadd [#allocation4], %s1657
      %s1659 = sshll.u32 [#allocation12], 4
      %s1660 = int_to_ptr.vmem [resolvable:$true] %s1659
      %1665 = dma.vmem_to_hbm [thread:$0]  %s1660, 2048, %s5, [#allocation4], 128, 128, 8
    $region45: #{dcan_upsample_interp_block.1} parent=1 // pred_fallthru
      _
    // Predicated region
    $region46: #{dcan_upsample_interp_block.1} parent=1 // pred_check
      _
    $region47: #{dcan_upsample_interp_block.1} parent=1 // pred_check_branch
      %1667 = sbr.rel (0) target = $region49
    $region48: #{dcan_upsample_interp_block.1} parent=1 // pred_region
      %1668 = dma.done [#allocation4], 2048
    $region49: #{dcan_upsample_interp_block.1} parent=1 // pred_fallthru
      _
    %1669 = vsyncpa [#allocation3], 1
    %1670 = vsyncpa [#allocation7], 1
    %1671 = vsyncpa [#allocation4], 1
    %1672 = vsyncpa [#allocation5], 1
    %1673 = vsyncpa [#allocation11], 1

</llo_original>
